<compile_context>
chip_gen: v5e
topology: v5e:2x2
jax: 0.10.0
libtpu: 0.0.40
codegen_flags: <defaults>
</compile_context>

<pallas_src>
import jax
import jax.numpy as jnp
from jax.experimental import pallas as pl
from jax.experimental.pallas import tpu as pltpu


# ---------------------------------------------------------------------------
# helpers: VMEM-aware tiling, version-robust compiler params / cost estimates
# ---------------------------------------------------------------------------

def _round_up(x, m):
    return (x + m - 1) // m * m


def _vmem_limit_bytes():
    """Generation-aware scoped-VMEM limit (v7x: 64 MiB phys, v5e/v6e: 128 MiB)."""
    try:
        cap = int(pltpu.get_tpu_info().vmem_capacity_bytes)
        return cap // 2
    except Exception:
        return 32 * 1024 * 1024


_VMEM_LIMIT = _vmem_limit_bytes()
_TILE_BUDGET = _VMEM_LIMIT * 3 // 4          # leave headroom for compiler scratch

_CP_CLS = getattr(pltpu, "CompilerParams", None) or getattr(pltpu, "TPUCompilerParams", None)


def _mosaic_params(n_axes):
    if _CP_CLS is None:
        return None
    try:
        return _CP_CLS(dimension_semantics=("parallel",) * n_axes,
                       vmem_limit_bytes=_VMEM_LIMIT)
    except TypeError:
        return _CP_CLS(dimension_semantics=("parallel",) * n_axes)


def _pallas_call(kernel, *, out_shape, grid, in_specs, out_specs, flops, bytes_accessed):
    kwargs = {}
    cp = _mosaic_params(len(grid))
    if cp is not None:
        kwargs["compiler_params"] = cp
    if hasattr(pl, "CostEstimate"):
        kwargs["cost_estimate"] = pl.CostEstimate(
            flops=int(flops), transcendentals=0, bytes_accessed=int(bytes_accessed))
    return pl.pallas_call(kernel, out_shape=out_shape, grid=grid,
                          in_specs=in_specs, out_specs=out_specs, **kwargs)


def _pick_tm(m_rows, bytes_per_row, resident_bytes):
    """Largest M tile (mult. of 16, <=1024) whose double-buffered tiles plus the
    resident weight buffers fit the VMEM tile budget."""
    avail = max(_TILE_BUDGET - resident_bytes, 2 * 1024 * 1024)
    tm = max(16, min(1024, avail // max(bytes_per_row, 1)))
    tm = (tm // 16) * 16
    if m_rows <= tm:
        tm = _round_up(m_rows, 16)
    return tm


def _im2col_nhwc(xpad, kh, kw, stride, oh, ow):
    """xpad: [N, Hp, Wp, C] -> [N*oh*ow, kh*kw*C]; column order (kh, kw, c)."""
    n, _, _, c = xpad.shape
    taps = []
    for i in range(kh):
        for j in range(kw):
            taps.append(xpad[:, i:i + stride * (oh - 1) + 1:stride,
                                j:j + stride * (ow - 1) + 1:stride, :])
    p = jnp.concatenate(taps, axis=-1)                  # [N, oh, ow, kh*kw*C]
    return p.reshape(n * oh * ow, kh * kw * c)


# ---------------------------------------------------------------------------
# Pallas kernels
# ---------------------------------------------------------------------------

def _down_gemm_kernel(a_ref, b_ref, o_ref):
    """Downconv GEMM (bf16 operands, f32 accum) fused with ReLU (uprelu)."""
    y = jnp.dot(a_ref[...], b_ref[...], preferred_element_type=jnp.float32)
    o_ref[...] = jnp.maximum(y, 0.0).astype(o_ref.dtype)


def _up_gemm_stats_kernel(a_ref, b_ref, y_ref, sum_ref, sq_ref):
    """Upconv (polyphase) GEMM; emits per-tile per-column sum / sum-of-squares
    from the f32 accumulator so BatchNorm stays exact under M tiling."""
    y = jnp.dot(a_ref[...], b_ref[...], preferred_element_type=jnp.float32)
    y_ref[...] = y.astype(y_ref.dtype)
    sum_ref[...] = jnp.sum(y, axis=0, keepdims=True)[None]
    sq_ref[...] = jnp.sum(y * y, axis=0, keepdims=True)[None]


def _bn_apply_kernel(y_ref, scale_ref, shift_ref, o_ref):
    """Second BN pass: y * scale + shift with per-column (phase, channel) params."""
    y = y_ref[...].astype(jnp.float32)
    o_ref[...] = y * scale_ref[...] + shift_ref[...]


# ---------------------------------------------------------------------------
# GEMM drivers (M-tiled, resident weights, lane-dense outputs)
# ---------------------------------------------------------------------------

def _down_gemm(a, b):
    m, k = a.shape
    n = b.shape[1]
    tm = _pick_tm(m, 2 * (k * 2 + n * 2), 2 * k * n * 2)
    mpad = _round_up(m, tm)
    a = jnp.pad(a, ((0, mpad - m), (0, 0)))
    out = _pallas_call(
        _down_gemm_kernel,
        out_shape=jax.ShapeDtypeStruct((mpad, n), jnp.bfloat16),
        grid=(mpad // tm,),
        in_specs=[pl.BlockSpec((tm, k), lambda i: (i, 0)),
                  pl.BlockSpec((k, n), lambda i: (0, 0))],
        out_specs=pl.BlockSpec((tm, n), lambda i: (i, 0)),
        flops=2 * mpad * k * n,
        bytes_accessed=(mpad * k + k * n + mpad * n) * 2,
    )(a, b)
    return out[:m]


def _up_gemm_bn(a, b, count):
    """Polyphase upconv GEMM + exact two-pass BatchNorm.

    a: [M, K] bf16 patches (shared k=3 im2col), b: [K, 4*cpad] bf16 phase-
    stacked weights, count: true element count per BN channel (N*H*W).
    Returns normalized f32 [M, 4*cpad]; columns are (phase-major, channel).
    """
    m, k = a.shape
    n = b.shape[1]
    cpad = n // 4
    tm = _pick_tm(m, 2 * (k * 2 + n * 2 + n * 4), 2 * k * n * 2)
    mpad = _round_up(m, tm)
    grid = (mpad // tm,)
    a = jnp.pad(a, ((0, mpad - m), (0, 0)))

    y, col_sum, col_sq = _pallas_call(
        _up_gemm_stats_kernel,
        out_shape=(jax.ShapeDtypeStruct((mpad, n), jnp.bfloat16),
                   jax.ShapeDtypeStruct((grid[0], 1, n), jnp.float32),
                   jax.ShapeDtypeStruct((grid[0], 1, n), jnp.float32)),
        grid=grid,
        in_specs=[pl.BlockSpec((tm, k), lambda i: (i, 0)),
                  pl.BlockSpec((k, n), lambda i: (0, 0))],
        out_specs=[pl.BlockSpec((tm, n), lambda i: (i, 0)),
                   pl.BlockSpec((1, 1, n), lambda i: (i, 0, 0)),
                   pl.BlockSpec((1, 1, n), lambda i: (i, 0, 0))],
        flops=2 * mpad * k * n + 4 * mpad * n,
        bytes_accessed=(mpad * k + k * n + mpad * n) * 2 + 2 * grid[0] * n * 4,
    )(a, b)

    # Global per-channel stats (padded rows / padded channels contribute zeros;
    # the 4 spatial phases of each channel are folded together).
    ch_sum = jnp.sum(col_sum[:, 0, :], axis=0).reshape(4, cpad).sum(axis=0)
    ch_sq = jnp.sum(col_sq[:, 0, :], axis=0).reshape(4, cpad).sum(axis=0)
    mean = ch_sum / count
    var = ch_sq / count - mean * mean                  # biased variance (PyTorch train)
    inv = jax.lax.rsqrt(var + 1e-5)                    # gamma = 1
    scale = jnp.tile(inv, (4,))[None, :]               # phase-major columns
    shift = jnp.tile(-mean * inv, (4,))[None, :]       # beta = 0

    out = _pallas_call(
        _bn_apply_kernel,
        out_shape=jax.ShapeDtypeStruct((mpad, n), jnp.float32),
        grid=grid,
        in_specs=[pl.BlockSpec((tm, n), lambda i: (i, 0)),
                  pl.BlockSpec((1, n), lambda i: (0, 0)),
                  pl.BlockSpec((1, n), lambda i: (0, 0))],
        out_specs=pl.BlockSpec((tm, n), lambda i: (i, 0)),
        flops=2 * mpad * n,
        bytes_accessed=mpad * n * 2 + 2 * n * 4 + mpad * n * 4,
    )(y, scale, shift)
    return out[:m]


# ---------------------------------------------------------------------------
# Polyphase ConvTranspose2d(k=4, s=2, p=1) weight construction.
# Output row y=2m+ph gathers h1[m-1] (kh=3) & h1[m] (kh=1) for ph=0, and
# h1[m] (kh=2) & h1[m+1] (kh=0) for ph=1.  With a shared k=3 stride-1 im2col
# over pad(h1, 1), tap th in {0,1,2} corresponds to h1[m-1+th].
# ---------------------------------------------------------------------------

_PHASE_TAPS = ({0: 3, 1: 1}, {1: 2, 2: 0})     # phase -> {tap: kernel index}


def _build_up_weight(w_up, cpad):
    """w_up: [inner_nc, outer_nc, 4, 4] (ConvTranspose2d layout) ->
    [9*inner_nc, 4*cpad] phase-stacked weights for the shared k=3 im2col."""
    inner_nc, outer_nc = w_up.shape[0], w_up.shape[1]
    b = jnp.zeros((3, 3, inner_nc, 4, cpad), jnp.float32)
    for ph in (0, 1):
        for pw in (0, 1):
            p = 2 * ph + pw
            for th, kh in _PHASE_TAPS[ph].items():
                for tw, kw in _PHASE_TAPS[pw].items():
                    b = b.at[th, tw, :, p, :outer_nc].set(w_up[:, :, kh, kw])
    return b.reshape(9 * inner_nc, 4 * cpad)


# ---------------------------------------------------------------------------
# Forward pass
# ---------------------------------------------------------------------------

def unet_innermost_forward(x, w_down, w_up):
    """x: [N, input_nc, H, W] f32; w_down: [inner_nc, input_nc, 4, 4];
    w_up (ConvTranspose2d layout): [inner_nc, outer_nc, 4, 4]."""
    n, c_in, h, w = x.shape
    inner_nc = w_down.shape[0]
    outer_nc = w_up.shape[1]
    h1, w1 = h // 2, w // 2
    inner_pad = _round_up(inner_nc, 128)       # lane-dense GEMM output stores
    outer_pad = _round_up(outer_nc, 128)

    # ---- down: LeakyReLU (on un-duplicated input) -> Conv2d(4,2,1) -> ReLU
    xa = jnp.where(x > 0, x, 0.2 * x)                           # LeakyReLU(0.2)
    xa = jnp.transpose(xa, (0, 2, 3, 1)).astype(jnp.bfloat16)   # NHWC, bf16 operands
    xp = jnp.pad(xa, ((0, 0), (1, 1), (1, 1), (0, 0)))
    a1 = _im2col_nhwc(xp, 4, 4, 2, h1, w1)                      # [N*h1*w1, 16*c_in]
    b1 = jnp.transpose(w_down, (2, 3, 1, 0)).reshape(16 * c_in, inner_nc)
    b1 = jnp.pad(b1, ((0, 0), (0, inner_pad - inner_nc))).astype(jnp.bfloat16)
    y1 = _down_gemm(a1, b1)                                     # [N*h1*w1, inner_pad]
    mid = y1[:, :inner_nc].reshape(n, h1, w1, inner_nc)         # NHWC bottleneck (bf16)

    # ---- up: ConvTranspose2d(4,2,1) via 4-phase decomposition (no zero-insert)
    #          sharing one k=3 stride-1 im2col, then BatchNorm2d (two-pass)
    mp = jnp.pad(mid, ((0, 0), (1, 1), (1, 1), (0, 0)))
    a2 = _im2col_nhwc(mp, 3, 3, 1, h1, w1)                      # [N*h1*w1, 9*inner_nc]
    b2 = _build_up_weight(w_up, outer_pad).astype(jnp.bfloat16)
    y2 = _up_gemm_bn(a2, b2, float(n * h * w))                  # [N*h1*w1, 4*outer_pad]

    # ---- phase interleave + NCHW + skip connection (layout-only, left to XLA)
    # TODO(synk): fuse the phase interleave / NCHW write and the concat with x
    # into the BN kernel's out_spec (plus input_output_aliases for the x half).
    up = y2.reshape(n, h1, w1, 2, 2, outer_pad)[..., :outer_nc]
    up = jnp.transpose(up, (0, 1, 3, 2, 4, 5)).reshape(n, h, w, outer_nc)
    up = jnp.transpose(up, (0, 3, 1, 2))                        # NCHW
    return jnp.concatenate([x, up], axis=1)

# TODO(synk): outermost / middle variants (submodule recursion, Tanh, Dropout)
# would compose the same GEMM kernels; only the innermost block is built here.


if __name__ == "__main__":
    # Innermost block: outer_nc = input_nc = 4, inner_nc = 8, spatial 16x16, batch 2.
    N, outer_nc, inner_nc, H, W = 2, 4, 8, 16, 16
    input_nc = outer_nc

    key = jax.random.PRNGKey(0)
    kx, kd, ku = jax.random.split(key, 3)
    x = jax.random.normal(kx, (N, input_nc, H, W), jnp.float32)
    w_down = 0.02 * jax.random.normal(kd, (inner_nc, input_nc, 4, 4), jnp.float32)
    w_up = 0.02 * jax.random.normal(ku, (inner_nc, outer_nc, 4, 4), jnp.float32)

    out = jax.jit(unet_innermost_forward)(x, w_down, w_up)
    out = jax.block_until_ready(out)

    assert out.shape == (N, input_nc + outer_nc, H, W), out.shape
    assert bool(jnp.all(jnp.isfinite(out)))
    # skip-connection half must equal the input exactly
    assert jnp.array_equal(out[:, :input_nc], x)
    print("KERNEL_OK")
</pallas_src>

<mosaic_0001>
module attributes {stable_mosaic.version = 11 : i64} {
  func.func @_down_gemm_kernel(%arg0: i32, %arg1: memref<128x64xbf16, #tpu.memory_space<vmem>>, %arg2: memref<64x128xbf16, #tpu.memory_space<vmem>>, %arg3: memref<128x128xbf16, #tpu.memory_space<vmem>>) attributes {dimension_semantics = [#tpu.dimension_semantics<parallel>], iteration_bounds = array<i64: 1>, scalar_prefetch = 0 : i64, scratch_operands = 0 : i64, tpu.core_type = #tpu.core_type<tc>, window_params = [{transform_indices = @transform_0, window_bounds = array<i64: 128, 64>}, {pipeline_mode = #tpu.pipeline_mode<synchronous>, transform_indices = @transform_1, window_bounds = array<i64: 64, 128>}, {transform_indices = @transform_2, window_bounds = array<i64: 128, 128>}]} {
    %c0 = arith.constant 0 : index
    %c0_0 = arith.constant 0 : index
    %0 = vector.load %arg1[%c0, %c0_0] : memref<128x64xbf16, #tpu.memory_space<vmem>>, vector<128x64xbf16>
    %c0_1 = arith.constant 0 : index
    %c0_2 = arith.constant 0 : index
    %1 = vector.load %arg2[%c0_1, %c0_2] : memref<64x128xbf16, #tpu.memory_space<vmem>>, vector<64x128xbf16>
    %cst = arith.constant dense<0.000000e+00> : vector<128x128xf32>
    %2 = tpu.matmul %0, %1, %cst {dimension_numbers = #tpu.dot_dimension_numbers<[1], [0], [0], [1], [0, 0, 1, 1], [], []>} : vector<128x64xbf16>, vector<64x128xbf16>, vector<128x128xf32> -> vector<128x128xf32>
    %cst_3 = arith.constant 0.000000e+00 : f32
    %3 = vector.broadcast %cst_3 : f32 to vector<128x128xf32>
    %4 = arith.maximumf %2, %3 : vector<128x128xf32>
    %5 = arith.truncf %4 : vector<128x128xf32> to vector<128x128xbf16>
    %c0_4 = arith.constant 0 : index
    %c0_5 = arith.constant 0 : index
    %6 = vector.load %arg3[%c0_4, %c0_5] : memref<128x128xbf16, #tpu.memory_space<vmem>>, vector<128x128xbf16>
    tpu.vector_store %arg3[%c0_4, %c0_5], %5 {strides = array<i32>} : memref<128x128xbf16, #tpu.memory_space<vmem>>, vector<128x128xbf16>,
    return
  }
  func.func @transform_0(%arg0: i32) -> (i32, i32) {
    %c0_i32 = arith.constant 0 : i32
    %c0_i32_0 = arith.constant 0 : i32
    return %arg0, %c0_i32 : i32, i32
  }
  func.func @transform_1(%arg0: i32) -> (i32, i32) {
    %c0_i32 = arith.constant 0 : i32
    %c0_i32_0 = arith.constant 0 : i32
    %c0_i32_1 = arith.constant 0 : i32
    return %c0_i32, %c0_i32_0 : i32, i32
  }
  func.func @transform_2(%arg0: i32) -> (i32, i32) {
    %c0_i32 = arith.constant 0 : i32
    %c0_i32_0 = arith.constant 0 : i32
    return %arg0, %c0_i32 : i32, i32
  }
}

module attributes {stable_mosaic.version = 11 : i64} {
  func.func @_up_gemm_stats_kernel(%arg0: i32, %arg1: memref<128x72xbf16, #tpu.memory_space<vmem>>, %arg2: memref<72x512xbf16, #tpu.memory_space<vmem>>, %arg3: memref<128x512xbf16, #tpu.memory_space<vmem>>, %arg4: memref<1x1x512xf32, #tpu.memory_space<vmem>>, %arg5: memref<1x1x512xf32, #tpu.memory_space<vmem>>) attributes {dimension_semantics = [#tpu.dimension_semantics<parallel>], iteration_bounds = array<i64: 1>, scalar_prefetch = 0 : i64, scratch_operands = 0 : i64, tpu.core_type = #tpu.core_type<tc>, window_params = [{transform_indices = @transform_0, window_bounds = array<i64: 128, 72>}, {pipeline_mode = #tpu.pipeline_mode<synchronous>, transform_indices = @transform_1, window_bounds = array<i64: 72, 512>}, {transform_indices = @transform_2, window_bounds = array<i64: 128, 512>}, {transform_indices = @transform_3, window_bounds = array<i64: 1, 1, 512>}, {transform_indices = @transform_4, window_bounds = array<i64: 1, 1, 512>}]} {
    %c0 = arith.constant 0 : index
    %c0_0 = arith.constant 0 : index
    %0 = vector.load %arg1[%c0, %c0_0] : memref<128x72xbf16, #tpu.memory_space<vmem>>, vector<128x72xbf16>
    %c0_1 = arith.constant 0 : index
    %c0_2 = arith.constant 0 : index
    %1 = vector.load %arg2[%c0_1, %c0_2] : memref<72x512xbf16, #tpu.memory_space<vmem>>, vector<72x512xbf16>
    %cst = arith.constant dense<0.000000e+00> : vector<128x512xf32>
    %2 = tpu.matmul %0, %1, %cst {dimension_numbers = #tpu.dot_dimension_numbers<[1], [0], [0], [1], [0, 0, 1, 1], [], []>} : vector<128x72xbf16>, vector<72x512xbf16>, vector<128x512xf32> -> vector<128x512xf32>
    %3 = arith.truncf %2 : vector<128x512xf32> to vector<128x512xbf16>
    %c0_3 = arith.constant 0 : index
    %c0_4 = arith.constant 0 : index
    %4 = vector.load %arg3[%c0_3, %c0_4] : memref<128x512xbf16, #tpu.memory_space<vmem>>, vector<128x512xbf16>
    tpu.vector_store %arg3[%c0_3, %c0_4], %3 {strides = array<i32>} : memref<128x512xbf16, #tpu.memory_space<vmem>>, vector<128x512xbf16>,
    %cst_5 = arith.constant dense<0.000000e+00> : vector<512xf32>
    %5 = vector.multi_reduction <add>, %2, %cst_5 [0] : vector<128x512xf32> to vector<512xf32>
    %6 = vector.shape_cast %5 : vector<512xf32> to vector<1x512xf32>
    %7 = vector.shape_cast %6 : vector<1x512xf32> to vector<1x1x512xf32>
    %c0_6 = arith.constant 0 : index
    %c0_7 = arith.constant 0 : index
    %c0_8 = arith.constant 0 : index
    %8 = vector.load %arg4[%c0_6, %c0_7, %c0_8] : memref<1x1x512xf32, #tpu.memory_space<vmem>>, vector<1x1x512xf32>
    tpu.vector_store %arg4[%c0_6, %c0_7, %c0_8], %7 {strides = array<i32>} : memref<1x1x512xf32, #tpu.memory_space<vmem>>, vector<1x1x512xf32>,
    %9 = arith.mulf %2, %2 : vector<128x512xf32>
    %cst_9 = arith.constant dense<0.000000e+00> : vector<512xf32>
    %10 = vector.multi_reduction <add>, %9, %cst_9 [0] : vector<128x512xf32> to vector<512xf32>
    %11 = vector.shape_cast %10 : vector<512xf32> to vector<1x512xf32>
    %12 = vector.shape_cast %11 : vector<1x512xf32> to vector<1x1x512xf32>
    %c0_10 = arith.constant 0 : index
    %c0_11 = arith.constant 0 : index
    %c0_12 = arith.constant 0 : index
    %13 = vector.load %arg5[%c0_10, %c0_11, %c0_12] : memref<1x1x512xf32, #tpu.memory_space<vmem>>, vector<1x1x512xf32>
    tpu.vector_store %arg5[%c0_10, %c0_11, %c0_12], %12 {strides = array<i32>} : memref<1x1x512xf32, #tpu.memory_space<vmem>>, vector<1x1x512xf32>,
    return
  }
  func.func @transform_0(%arg0: i32) -> (i32, i32) {
    %c0_i32 = arith.constant 0 : i32
    %c0_i32_0 = arith.constant 0 : i32
    return %arg0, %c0_i32 : i32, i32
  }
  func.func @transform_1(%arg0: i32) -> (i32, i32) {
    %c0_i32 = arith.constant 0 : i32
    %c0_i32_0 = arith.constant 0 : i32
    %c0_i32_1 = arith.constant 0 : i32
    return %c0_i32, %c0_i32_0 : i32, i32
  }
  func.func @transform_2(%arg0: i32) -> (i32, i32) {
    %c0_i32 = arith.constant 0 : i32
    %c0_i32_0 = arith.constant 0 : i32
    return %arg0, %c0_i32 : i32, i32
  }
  func.func @transform_3(%arg0: i32) -> (i32, i32, i32) {
    %c0_i32 = arith.constant 0 : i32
    %c0_i32_0 = arith.constant 0 : i32
    %c0_i32_1 = arith.constant 0 : i32
    return %arg0, %c0_i32, %c0_i32_0 : i32, i32, i32
  }
  func.func @transform_4(%arg0: i32) -> (i32, i32, i32) {
    %c0_i32 = arith.constant 0 : i32
    %c0_i32_0 = arith.constant 0 : i32
    %c0_i32_1 = arith.constant 0 : i32
    return %arg0, %c0_i32, %c0_i32_0 : i32, i32, i32
  }
}

module attributes {stable_mosaic.version = 11 : i64} {
  func.func @_bn_apply_kernel(%arg0: i32, %arg1: memref<128x512xbf16, #tpu.memory_space<vmem>>, %arg2: memref<1x512xf32, #tpu.memory_space<vmem>>, %arg3: memref<1x512xf32, #tpu.memory_space<vmem>>, %arg4: memref<128x512xf32, #tpu.memory_space<vmem>>) attributes {dimension_semantics = [#tpu.dimension_semantics<parallel>], iteration_bounds = array<i64: 1>, scalar_prefetch = 0 : i64, scratch_operands = 0 : i64, tpu.core_type = #tpu.core_type<tc>, window_params = [{transform_indices = @transform_0, window_bounds = array<i64: 128, 512>}, {pipeline_mode = #tpu.pipeline_mode<synchronous>, transform_indices = @transform_1, window_bounds = array<i64: 1, 512>}, {pipeline_mode = #tpu.pipeline_mode<synchronous>, transform_indices = @transform_2, window_bounds = array<i64: 1, 512>}, {transform_indices = @transform_3, window_bounds = array<i64: 128, 512>}]} {
    %c0 = arith.constant 0 : index
    %c0_0 = arith.constant 0 : index
    %0 = vector.load %arg1[%c0, %c0_0] : memref<128x512xbf16, #tpu.memory_space<vmem>>, vector<128x512xbf16>
    %1 = arith.extf %0 : vector<128x512xbf16> to vector<128x512xf32>
    %c0_1 = arith.constant 0 : index
    %c0_2 = arith.constant 0 : index
    %2 = vector.load %arg2[%c0_1, %c0_2] : memref<1x512xf32, #tpu.memory_space<vmem>>, vector<1x512xf32>
    %3 = vector.broadcast %2 : vector<1x512xf32> to vector<128x512xf32>
    %4 = arith.mulf %1, %3 : vector<128x512xf32>
    %c0_3 = arith.constant 0 : index
    %c0_4 = arith.constant 0 : index
    %5 = vector.load %arg3[%c0_3, %c0_4] : memref<1x512xf32, #tpu.memory_space<vmem>>, vector<1x512xf32>
    %6 = vector.broadcast %5 : vector<1x512xf32> to vector<128x512xf32>
    %7 = arith.addf %4, %6 : vector<128x512xf32>
    %c0_5 = arith.constant 0 : index
    %c0_6 = arith.constant 0 : index
    %8 = vector.load %arg4[%c0_5, %c0_6] : memref<128x512xf32, #tpu.memory_space<vmem>>, vector<128x512xf32>
    tpu.vector_store %arg4[%c0_5, %c0_6], %7 {strides = array<i32>} : memref<128x512xf32, #tpu.memory_space<vmem>>, vector<128x512xf32>,
    return
  }
  func.func @transform_0(%arg0: i32) -> (i32, i32) {
    %c0_i32 = arith.constant 0 : i32
    %c0_i32_0 = arith.constant 0 : i32
    return %arg0, %c0_i32 : i32, i32
  }
  func.func @transform_1(%arg0: i32) -> (i32, i32) {
    %c0_i32 = arith.constant 0 : i32
    %c0_i32_0 = arith.constant 0 : i32
    %c0_i32_1 = arith.constant 0 : i32
    return %c0_i32, %c0_i32_0 : i32, i32
  }
  func.func @transform_2(%arg0: i32) -> (i32, i32) {
    %c0_i32 = arith.constant 0 : i32
    %c0_i32_0 = arith.constant 0 : i32
    %c0_i32_1 = arith.constant 0 : i32
    return %c0_i32, %c0_i32_0 : i32, i32
  }
  func.func @transform_3(%arg0: i32) -> (i32, i32) {
    %c0_i32 = arith.constant 0 : i32
    %c0_i32_0 = arith.constant 0 : i32
    return %arg0, %c0_i32 : i32, i32
  }
}

</mosaic_0001>

<llo_original>
// kernel: unet_innermost_forward.3
$region0: #{unet_innermost_forward.3}
  #allocation0 [shape = 'u32[]', space=smem, size = 0x4, offset = 0x4, fixed_abs, tag = 'smem constant byte address 0x4 - core index']
  #allocation1 [shape = 'u32[72,128]{1,0:T(1,128)}', space=vmem, size = 0x9000, scoped, tag = 'internal scratch']
  %s0 = inlined_call_operand.vmem [shape: bf16[128,64], index: 0, kind: input, shape index: {}]
  %s1 = inlined_call_operand.vmem [shape: bf16[64,128], index: 1, kind: input, shape index: {}]
  %s2 = inlined_call_operand.vmem [shape: bf16[128,128], index: 2, kind: output, shape index: {}]
  %s3 = sld [smem:[#allocation0]]
  $region18: #{unet_innermost_forward.3} parent=0
    _
  %s5 = ssub.s32 1, %s3
  %s6 = scalar_select 0, %s5, %s3
  // Predicated region
  $region2: #{unet_innermost_forward.3} parent=0 // pred_check
    _
  $region3: #{unet_innermost_forward.3} parent=0 // pred_check_branch
    %8 = sbr.rel (0) target = $region5
  $region4: #{unet_innermost_forward.3} parent=0 // pred_region
    _
  $region5: #{unet_innermost_forward.3} parent=0 // pred_fallthru
    _
  // Predicated region
  $region6: #{unet_innermost_forward.3} parent=0 // pred_check
    _
  $region7: #{unet_innermost_forward.3} parent=0 // pred_check_branch
    %10 = sbr.rel (0) target = $region9
  $region8: #{unet_innermost_forward.3} parent=0 // pred_region
    _
  $region9: #{unet_innermost_forward.3} parent=0 // pred_fallthru
    _
  %v12 = vld [vmem:[%s0] sm:$0xf]
  %v13 = vld [vmem:[%s0 + $0x4] sm:$0xf]
  %v14 = vld [vmem:[%s0 + $0x8] sm:$0xf]
  %v15 = vld [vmem:[%s0 + $0xc] sm:$0xf]
  %v16 = vld [vmem:[%s0 + $0x10] sm:$0xf]
  %v17 = vld [vmem:[%s0 + $0x14] sm:$0xf]
  %v18 = vld [vmem:[%s0 + $0x18] sm:$0xf]
  %v19 = vld [vmem:[%s0 + $0x1c] sm:$0xf]
  %v20 = vld [vmem:[%s0 + $0x20] sm:$0xf]
  %v21 = vld [vmem:[%s0 + $0x24] sm:$0xf]
  %v22 = vld [vmem:[%s0 + $0x28] sm:$0xf]
  %v23 = vld [vmem:[%s0 + $0x2c] sm:$0xf]
  %v24 = vld [vmem:[%s0 + $0x30] sm:$0xf]
  %v25 = vld [vmem:[%s0 + $0x34] sm:$0xf]
  %v26 = vld [vmem:[%s0 + $0x38] sm:$0xf]
  %v27 = vld [vmem:[%s0 + $0x3c] sm:$0xf]
  %v28 = vld [vmem:[%s1] sm:$0xf]
  %v29 = vld [vmem:[%s1 + $0x4] sm:$0xf]
  %v30 = vld [vmem:[%s1 + $0x8] sm:$0xf]
  %v31 = vld [vmem:[%s1 + $0xc] sm:$0xf]
  %v32 = vld [vmem:[%s1 + $0x10] sm:$0xf]
  %v33 = vld [vmem:[%s1 + $0x14] sm:$0xf]
  %v34 = vld [vmem:[%s1 + $0x18] sm:$0xf]
  %v35 = vld [vmem:[%s1 + $0x1c] sm:$0xf]
  %v52 = vunpack.c.l.b16 %v12
  %v53 = vunpack.c.l.b16 %v13
  %v54 = vunpack.c.l.b16 %v14
  %v55 = vunpack.c.l.b16 %v15
  %v56 = vunpack.c.l.b16 %v16
  %v57 = vunpack.c.l.b16 %v17
  %v58 = vunpack.c.l.b16 %v18
  %v59 = vunpack.c.l.b16 %v19
  %v60 = vunpack.c.l.b16 %v20
  %v61 = vunpack.c.l.b16 %v21
  %v62 = vunpack.c.l.b16 %v22
  %v63 = vunpack.c.l.b16 %v23
  %v64 = vunpack.c.l.b16 %v24
  %v65 = vunpack.c.l.b16 %v25
  %v66 = vunpack.c.l.b16 %v26
  %v67 = vunpack.c.l.b16 %v27
  %v68 = vpack.c.b16 %v53, %v52
  %v69 = vpack.c.b16 %v55, %v54
  %v70 = vpack.c.b16 %v57, %v56
  %v71 = vpack.c.b16 %v59, %v58
  %v72 = vpack.c.b16 %v61, %v60
  %v73 = vpack.c.b16 %v63, %v62
  %v74 = vpack.c.b16 %v65, %v64
  %v75 = vpack.c.b16 %v67, %v66
  %v84 = vunpack.c.l.b16 %v28
  %v85 = vunpack.c.l.b16 %v29
  %v86 = vunpack.c.l.b16 %v30
  %v87 = vunpack.c.l.b16 %v31
  %v88 = vunpack.c.l.b16 %v32
  %v89 = vunpack.c.l.b16 %v33
  %v90 = vunpack.c.l.b16 %v34
  %v91 = vunpack.c.l.b16 %v35
  %v92 = vpack.c.b16 %v85, %v84
  %v93 = vpack.c.b16 %v87, %v86
  %v94 = vpack.c.b16 %v89, %v88
  %v95 = vpack.c.b16 %v91, %v90
  %vm100 = vcmask 523264
  %v102 = vsel %vm100, %v68, 0
  %v105 = vsel %vm100, %v69, 0
  %v108 = vsel %vm100, %v70, 0
  %v111 = vsel %vm100, %v71, 0
  %v114 = vsel %vm100, %v72, 0
  %v117 = vsel %vm100, %v73, 0
  %v120 = vsel %vm100, %v74, 0
  %v123 = vsel %vm100, %v75, 0
  %125 = vmatpush.bf16.msra.mxu0 0
  %126 = vmatpush.bf16.msra.mxu0 0
  %127 = vmatpush.bf16.msra.mxu0 0
  %128 = vmatpush.bf16.msra.mxu0 0
  %129 = vmatpush.bf16.msra.mxu0 %v95
  %130 = vmatpush.bf16.msra.mxu0 %v94
  %131 = vmatpush.bf16.msra.mxu0 %v93
  %132 = vmatpush.bf16.msra.mxu0 %v92
  %133 = vmatmul.bf16.gmra.mxu0 %v102
  %v134 = vpop.f32.mrf.mxu0
  %v135 = vadd.f32 0.0, %v134
  %v136 = vpop.f32.mrf.mxu0
  %v137 = vadd.f32 0.0, %v136
  %138 = vmatmul.bf16.gmra.mxu0 %v105
  %v139 = vpop.f32.mrf.mxu0
  %v140 = vadd.f32 0.0, %v139
  %v141 = vpop.f32.mrf.mxu0
  %v142 = vadd.f32 0.0, %v141
  %143 = vmatmul.bf16.gmra.mxu0 %v108
  %v144 = vpop.f32.mrf.mxu0
  %v145 = vadd.f32 0.0, %v144
  %v146 = vpop.f32.mrf.mxu0
  %v147 = vadd.f32 0.0, %v146
  %148 = vmatmul.bf16.gmra.mxu0 %v111
  %v149 = vpop.f32.mrf.mxu0
  %v150 = vadd.f32 0.0, %v149
  %v151 = vpop.f32.mrf.mxu0
  %v152 = vadd.f32 0.0, %v151
  %153 = vmatmul.bf16.gmra.mxu0 %v114
  %v154 = vpop.f32.mrf.mxu0
  %v155 = vadd.f32 0.0, %v154
  %v156 = vpop.f32.mrf.mxu0
  %v157 = vadd.f32 0.0, %v156
  %158 = vmatmul.bf16.gmra.mxu0 %v117
  %v159 = vpop.f32.mrf.mxu0
  %v160 = vadd.f32 0.0, %v159
  %v161 = vpop.f32.mrf.mxu0
  %v162 = vadd.f32 0.0, %v161
  %163 = vmatmul.bf16.gmra.mxu0 %v120
  %v164 = vpop.f32.mrf.mxu0
  %v165 = vadd.f32 0.0, %v164
  %v166 = vpop.f32.mrf.mxu0
  %v167 = vadd.f32 0.0, %v166
  %168 = vmatmul.bf16.gmra.mxu0 %v123
  %v169 = vpop.f32.mrf.mxu0
  %v170 = vadd.f32 0.0, %v169
  %v171 = vpop.f32.mrf.mxu0
  %v172 = vadd.f32 0.0, %v171
  %173 = vdwg.mxu0
  %v174 = vmax.f32 %v135, 0.0
  %v175 = vmax.f32 %v137, 0.0
  %v176 = vmax.f32 %v140, 0.0
  %v177 = vmax.f32 %v142, 0.0
  %v178 = vmax.f32 %v145, 0.0
  %v179 = vmax.f32 %v147, 0.0
  %v180 = vmax.f32 %v150, 0.0
  %v181 = vmax.f32 %v152, 0.0
  %v182 = vmax.f32 %v155, 0.0
  %v183 = vmax.f32 %v157, 0.0
  %v184 = vmax.f32 %v160, 0.0
  %v185 = vmax.f32 %v162, 0.0
  %v186 = vmax.f32 %v165, 0.0
  %v187 = vmax.f32 %v167, 0.0
  %v188 = vmax.f32 %v170, 0.0
  %v189 = vmax.f32 %v172, 0.0
  %v190 = vpack.c.bf16 %v174, %v174
  %v191 = vpack.c.bf16 %v175, %v175
  %v192 = vpack.c.bf16 %v176, %v176
  %v193 = vpack.c.bf16 %v177, %v177
  %v194 = vpack.c.bf16 %v178, %v178
  %v195 = vpack.c.bf16 %v179, %v179
  %v196 = vpack.c.bf16 %v180, %v180
  %v197 = vpack.c.bf16 %v181, %v181
  %v198 = vpack.c.bf16 %v182, %v182
  %v199 = vpack.c.bf16 %v183, %v183
  %v200 = vpack.c.bf16 %v184, %v184
  %v201 = vpack.c.bf16 %v185, %v185
  %v202 = vpack.c.bf16 %v186, %v186
  %v203 = vpack.c.bf16 %v187, %v187
  %v204 = vpack.c.bf16 %v188, %v188
  %v205 = vpack.c.bf16 %v189, %v189
  %206 = vst [vmem:[%s2] sm:$0xf] %v190
  %207 = vst [vmem:[%s2 + $0x4] sm:$0xf] %v191
  %208 = vst [vmem:[%s2 + $0x8] sm:$0xf] %v192
  %209 = vst [vmem:[%s2 + $0xc] sm:$0xf] %v193
  %210 = vst [vmem:[%s2 + $0x10] sm:$0xf] %v194
  %211 = vst [vmem:[%s2 + $0x14] sm:$0xf] %v195
  %212 = vst [vmem:[%s2 + $0x18] sm:$0xf] %v196
  %213 = vst [vmem:[%s2 + $0x1c] sm:$0xf] %v197
  %214 = vst [vmem:[%s2 + $0x20] sm:$0xf] %v198
  %215 = vst [vmem:[%s2 + $0x24] sm:$0xf] %v199
  %216 = vst [vmem:[%s2 + $0x28] sm:$0xf] %v200
  %217 = vst [vmem:[%s2 + $0x2c] sm:$0xf] %v201
  %218 = vst [vmem:[%s2 + $0x30] sm:$0xf] %v202
  %219 = vst [vmem:[%s2 + $0x34] sm:$0xf] %v203
  %220 = vst [vmem:[%s2 + $0x38] sm:$0xf] %v204
  %221 = vst [vmem:[%s2 + $0x3c] sm:$0xf] %v205
  // Predicated region
  $region10: #{unet_innermost_forward.3} parent=0 // pred_check
    _
  $region11: #{unet_innermost_forward.3} parent=0 // pred_check_branch
    %223 = sbr.rel (0) target = $region13
  $region12: #{unet_innermost_forward.3} parent=0 // pred_region
    _
  $region13: #{unet_innermost_forward.3} parent=0 // pred_fallthru
    _
  // Predicated region
  $region14: #{unet_innermost_forward.3} parent=0 // pred_check
    _
  $region15: #{unet_innermost_forward.3} parent=0 // pred_check_branch
    %225 = sbr.rel (0) target = $region17
  $region16: #{unet_innermost_forward.3} parent=0 // pred_region
    _
  $region17: #{unet_innermost_forward.3} parent=0 // pred_fallthru
    _

// kernel: tile.13
$region0: #{tile.13}
  #allocation0 [shape = 's32[1]{0}', space=sflag, size = 0x4, scoped, tag = 'scoped memory for tile.13']
  %s0 = inlined_call_operand.vmem [shape: f32[128], index: 0, kind: input, shape index: {}]
  %s1 = inlined_call_operand.vmem [shape: f32[4,128], index: 1, kind: output, shape index: {}]
  // Predicated region
  $region2: #{tile.13} parent=0 // pred_check
    _
  $region3: #{tile.13} parent=0 // pred_check_branch
    %3 = sbr.rel (0) target = $region5
  $region4: #{tile.13} parent=0 // pred_region
    _
  $region5: #{tile.13} parent=0 // pred_fallthru
    _
  %v4 = vld [vmem:[%s0] ss:$0 sm:$0xff]
  %5 = vst [vmem:[%s1] sm:$0xf] %v4

// kernel: unet_innermost_forward.4
$region0: #{unet_innermost_forward.4}
  #allocation0 [shape = 'u32[]', space=smem, size = 0x4, offset = 0x4, fixed_abs, tag = 'smem constant byte address 0x4 - core index']
  #allocation1 [shape = 'u32[72,128]{1,0:T(1,128)}', space=vmem, size = 0x9000, scoped, tag = 'internal scratch']
  %s0 = inlined_call_operand.vmem [shape: bf16[128,72], index: 0, kind: input, shape index: {}]
  %s1 = inlined_call_operand.vmem [shape: bf16[72,512], index: 1, kind: input, shape index: {}]
  %s2 = inlined_call_operand.vmem [shape: bf16[128,512], index: 2, kind: output, shape index: {0}]
  %s3 = inlined_call_operand.vmem [shape: f32[1,1,512], index: 3, kind: output, shape index: {1}]
  %s4 = inlined_call_operand.vmem [shape: f32[1,1,512], index: 4, kind: output, shape index: {2}]
  %5 = xla_tuple %s2, %s3, %s4
  %s6 = sld [smem:[#allocation0]]
  $region34: #{unet_innermost_forward.4} parent=0
    _
  %s8 = ssub.s32 1, %s6
  %s9 = scalar_select 0, %s8, %s6
  // Predicated region
  $region2: #{unet_innermost_forward.4} parent=0 // pred_check
    _
  $region3: #{unet_innermost_forward.4} parent=0 // pred_check_branch
    %11 = sbr.rel (0) target = $region5
  $region4: #{unet_innermost_forward.4} parent=0 // pred_region
    _
  $region5: #{unet_innermost_forward.4} parent=0 // pred_fallthru
    _
  // Predicated region
  $region6: #{unet_innermost_forward.4} parent=0 // pred_check
    _
  $region7: #{unet_innermost_forward.4} parent=0 // pred_check_branch
    %13 = sbr.rel (0) target = $region9
  $region8: #{unet_innermost_forward.4} parent=0 // pred_region
    _
  $region9: #{unet_innermost_forward.4} parent=0 // pred_fallthru
    _
  %v15 = vld [vmem:[%s0] sm:$0xf]
  %v16 = vld [vmem:[%s0 + $0x4] sm:$0xf]
  %v17 = vld [vmem:[%s0 + $0x8] sm:$0xf]
  %v18 = vld [vmem:[%s0 + $0xc] sm:$0xf]
  %v19 = vld [vmem:[%s0 + $0x10] sm:$0xf]
  %v20 = vld [vmem:[%s0 + $0x14] sm:$0xf]
  %v21 = vld [vmem:[%s0 + $0x18] sm:$0xf]
  %v22 = vld [vmem:[%s0 + $0x1c] sm:$0xf]
  %v23 = vld [vmem:[%s0 + $0x20] sm:$0xf]
  %v24 = vld [vmem:[%s0 + $0x24] sm:$0xf]
  %v25 = vld [vmem:[%s0 + $0x28] sm:$0xf]
  %v26 = vld [vmem:[%s0 + $0x2c] sm:$0xf]
  %v27 = vld [vmem:[%s0 + $0x30] sm:$0xf]
  %v28 = vld [vmem:[%s0 + $0x34] sm:$0xf]
  %v29 = vld [vmem:[%s0 + $0x38] sm:$0xf]
  %v30 = vld [vmem:[%s0 + $0x3c] sm:$0xf]
  %v31 = vld [vmem:[%s1] sm:$0xff]
  %v32 = vld [vmem:[%s1 + $0x8] sm:$0xff]
  %v33 = vld [vmem:[%s1 + $0x10] sm:$0xff]
  %v34 = vld [vmem:[%s1 + $0x18] sm:$0xff]
  %v35 = vld [vmem:[%s1 + $0x20] sm:$0xff]
  %v36 = vld [vmem:[%s1 + $0x28] sm:$0xff]
  %v37 = vld [vmem:[%s1 + $0x30] sm:$0xff]
  %v38 = vld [vmem:[%s1 + $0x38] sm:$0xff]
  %v39 = vld [vmem:[%s1 + $0x40] sm:$0xff]
  %v40 = vld [vmem:[%s1 + $0x48] sm:$0xff]
  %v41 = vld [vmem:[%s1 + $0x50] sm:$0xff]
  %v42 = vld [vmem:[%s1 + $0x58] sm:$0xff]
  %v43 = vld [vmem:[%s1 + $0x60] sm:$0xff]
  %v44 = vld [vmem:[%s1 + $0x68] sm:$0xff]
  %v45 = vld [vmem:[%s1 + $0x70] sm:$0xff]
  %v46 = vld [vmem:[%s1 + $0x78] sm:$0xff]
  %v47 = vld [vmem:[%s1 + $0x80] sm:$0xff]
  %v48 = vld [vmem:[%s1 + $0x88] sm:$0xff]
  %v65 = vunpack.c.l.b16 %v15
  %v66 = vunpack.c.l.b16 %v16
  %v67 = vunpack.c.l.b16 %v17
  %v68 = vunpack.c.l.b16 %v18
  %v69 = vunpack.c.l.b16 %v19
  %v70 = vunpack.c.l.b16 %v20
  %v71 = vunpack.c.l.b16 %v21
  %v72 = vunpack.c.l.b16 %v22
  %v73 = vunpack.c.l.b16 %v23
  %v74 = vunpack.c.l.b16 %v24
  %v75 = vunpack.c.l.b16 %v25
  %v76 = vunpack.c.l.b16 %v26
  %v77 = vunpack.c.l.b16 %v27
  %v78 = vunpack.c.l.b16 %v28
  %v79 = vunpack.c.l.b16 %v29
  %v80 = vunpack.c.l.b16 %v30
  %v81 = vpack.c.b16 %v66, %v65
  %v82 = vpack.c.b16 %v68, %v67
  %v83 = vpack.c.b16 %v70, %v69
  %v84 = vpack.c.b16 %v72, %v71
  %v85 = vpack.c.b16 %v74, %v73
  %v86 = vpack.c.b16 %v76, %v75
  %v87 = vpack.c.b16 %v78, %v77
  %v88 = vpack.c.b16 %v80, %v79
  %v107 = vunpack.c.l.b16 %v31
  %v108 = vunpack.c.h.b16 %v31
  %v109 = vunpack.c.l.b16 %v32
  %v110 = vunpack.c.h.b16 %v32
  %v111 = vunpack.c.l.b16 %v33
  %v112 = vunpack.c.h.b16 %v33
  %v113 = vunpack.c.l.b16 %v34
  %v114 = vunpack.c.h.b16 %v34
  %v115 = vunpack.c.l.b16 %v35
  %v116 = vunpack.c.h.b16 %v35
  %v117 = vunpack.c.l.b16 %v36
  %v118 = vunpack.c.h.b16 %v36
  %v119 = vunpack.c.l.b16 %v37
  %v120 = vunpack.c.h.b16 %v37
  %v121 = vunpack.c.l.b16 %v38
  %v122 = vunpack.c.h.b16 %v38
  %v123 = vunpack.c.l.b16 %v39
  %v124 = vunpack.c.h.b16 %v39
  %v125 = vunpack.c.l.b16 %v40
  %v126 = vunpack.c.h.b16 %v40
  %v127 = vunpack.c.l.b16 %v41
  %v128 = vunpack.c.h.b16 %v41
  %v129 = vunpack.c.l.b16 %v42
  %v130 = vunpack.c.h.b16 %v42
  %v131 = vunpack.c.l.b16 %v43
  %v132 = vunpack.c.h.b16 %v43
  %v133 = vunpack.c.l.b16 %v44
  %v134 = vunpack.c.h.b16 %v44
  %v135 = vunpack.c.l.b16 %v45
  %v136 = vunpack.c.h.b16 %v45
  %v137 = vunpack.c.l.b16 %v46
  %v138 = vunpack.c.h.b16 %v46
  %v139 = vunpack.c.l.b16 %v47
  %v140 = vunpack.c.h.b16 %v47
  %v141 = vunpack.c.l.b16 %v48
  %v142 = vunpack.c.h.b16 %v48
  %v143 = vpack.c.b16 %v111, %v107
  %v144 = vpack.c.b16 %v112, %v108
  %v145 = vpack.c.b16 %v113, %v109
  %v146 = vpack.c.b16 %v114, %v110
  %v147 = vpack.c.b16 %v119, %v115
  %v148 = vpack.c.b16 %v120, %v116
  %v149 = vpack.c.b16 %v121, %v117
  %v150 = vpack.c.b16 %v122, %v118
  %v151 = vpack.c.b16 %v127, %v123
  %v152 = vpack.c.b16 %v128, %v124
  %v153 = vpack.c.b16 %v129, %v125
  %v154 = vpack.c.b16 %v130, %v126
  %v155 = vpack.c.b16 %v135, %v131
  %v156 = vpack.c.b16 %v136, %v132
  %v157 = vpack.c.b16 %v137, %v133
  %v158 = vpack.c.b16 %v138, %v134
  %v159 = vpack.c.b16 %v139, %v139
  %v160 = vpack.c.b16 %v140, %v140
  %v161 = vpack.c.b16 %v141, %v141
  %v162 = vpack.c.b16 %v142, %v142
  %vm179 = vcmask 588800
  %v181 = vsel %vm179, %v81, 0
  %v184 = vsel %vm179, %v82, 0
  %v187 = vsel %vm179, %v83, 0
  %v190 = vsel %vm179, %v84, 0
  %v193 = vsel %vm179, %v85, 0
  %v196 = vsel %vm179, %v86, 0
  %v199 = vsel %vm179, %v87, 0
  %v202 = vsel %vm179, %v88, 0
  %vm204 = vcmask 1043456
  %v206 = vsel %vm204, %v159, 0
  %v209 = vsel %vm204, %v160, 0
  %v212 = vsel %vm204, %v161, 0
  %v215 = vsel %vm204, %v162, 0
  %217 = vmatpush.bf16.msra.mxu0 0
  %218 = vmatpush.bf16.msra.mxu0 0
  %219 = vmatpush.bf16.msra.mxu0 0
  %220 = vmatpush.bf16.msra.mxu0 %v206
  %221 = vmatpush.bf16.msra.mxu0 %v155
  %222 = vmatpush.bf16.msra.mxu0 %v151
  %223 = vmatpush.bf16.msra.mxu0 %v147
  %224 = vmatpush.bf16.msra.mxu0 %v143
  %225 = vmatmul.bf16.gmra.mxu0 %v181
  %v226 = vpop.f32.mrf.mxu0
  %v227 = vadd.f32 0.0, %v226
  %v228 = vpop.f32.mrf.mxu0
  %v229 = vadd.f32 0.0, %v228
  %230 = vmatmul.bf16.gmra.mxu0 %v184
  %v231 = vpop.f32.mrf.mxu0
  %v232 = vadd.f32 0.0, %v231
  %v233 = vpop.f32.mrf.mxu0
  %v234 = vadd.f32 0.0, %v233
  %235 = vmatmul.bf16.gmra.mxu0 %v187
  %v236 = vpop.f32.mrf.mxu0
  %v237 = vadd.f32 0.0, %v236
  %v238 = vpop.f32.mrf.mxu0
  %v239 = vadd.f32 0.0, %v238
  %240 = vmatmul.bf16.gmra.mxu0 %v190
  %v241 = vpop.f32.mrf.mxu0
  %v242 = vadd.f32 0.0, %v241
  %v243 = vpop.f32.mrf.mxu0
  %v244 = vadd.f32 0.0, %v243
  %245 = vmatmul.bf16.gmra.mxu0 %v193
  %v246 = vpop.f32.mrf.mxu0
  %v247 = vadd.f32 0.0, %v246
  %v248 = vpop.f32.mrf.mxu0
  %v249 = vadd.f32 0.0, %v248
  %250 = vmatmul.bf16.gmra.mxu0 %v196
  %v251 = vpop.f32.mrf.mxu0
  %v252 = vadd.f32 0.0, %v251
  %v253 = vpop.f32.mrf.mxu0
  %v254 = vadd.f32 0.0, %v253
  %255 = vmatmul.bf16.gmra.mxu0 %v199
  %v256 = vpop.f32.mrf.mxu0
  %v257 = vadd.f32 0.0, %v256
  %v258 = vpop.f32.mrf.mxu0
  %v259 = vadd.f32 0.0, %v258
  %260 = vmatmul.bf16.gmra.mxu0 %v202
  %v261 = vpop.f32.mrf.mxu0
  %v262 = vadd.f32 0.0, %v261
  %v263 = vpop.f32.mrf.mxu0
  %v264 = vadd.f32 0.0, %v263
  %265 = vdwg.mxu0
  %266 = vmatpush.bf16.msra.mxu0 0
  %267 = vmatpush.bf16.msra.mxu0 0
  %268 = vmatpush.bf16.msra.mxu0 0
  %269 = vmatpush.bf16.msra.mxu0 %v209
  %270 = vmatpush.bf16.msra.mxu0 %v156
  %271 = vmatpush.bf16.msra.mxu0 %v152
  %272 = vmatpush.bf16.msra.mxu0 %v148
  %273 = vmatpush.bf16.msra.mxu0 %v144
  %274 = vmatmul.bf16.gmra.mxu0 %v181
  %v275 = vpop.f32.mrf.mxu0
  %v276 = vadd.f32 0.0, %v275
  %v277 = vpop.f32.mrf.mxu0
  %v278 = vadd.f32 0.0, %v277
  %279 = vmatmul.bf16.gmra.mxu0 %v184
  %v280 = vpop.f32.mrf.mxu0
  %v281 = vadd.f32 0.0, %v280
  %v282 = vpop.f32.mrf.mxu0
  %v283 = vadd.f32 0.0, %v282
  %284 = vmatmul.bf16.gmra.mxu0 %v187
  %v285 = vpop.f32.mrf.mxu0
  %v286 = vadd.f32 0.0, %v285
  %v287 = vpop.f32.mrf.mxu0
  %v288 = vadd.f32 0.0, %v287
  %289 = vmatmul.bf16.gmra.mxu0 %v190
  %v290 = vpop.f32.mrf.mxu0
  %v291 = vadd.f32 0.0, %v290
  %v292 = vpop.f32.mrf.mxu0
  %v293 = vadd.f32 0.0, %v292
  %294 = vmatmul.bf16.gmra.mxu0 %v193
  %v295 = vpop.f32.mrf.mxu0
  %v296 = vadd.f32 0.0, %v295
  %v297 = vpop.f32.mrf.mxu0
  %v298 = vadd.f32 0.0, %v297
  %299 = vmatmul.bf16.gmra.mxu0 %v196
  %v300 = vpop.f32.mrf.mxu0
  %v301 = vadd.f32 0.0, %v300
  %v302 = vpop.f32.mrf.mxu0
  %v303 = vadd.f32 0.0, %v302
  %304 = vmatmul.bf16.gmra.mxu0 %v199
  %v305 = vpop.f32.mrf.mxu0
  %v306 = vadd.f32 0.0, %v305
  %v307 = vpop.f32.mrf.mxu0
  %v308 = vadd.f32 0.0, %v307
  %309 = vmatmul.bf16.gmra.mxu0 %v202
  %v310 = vpop.f32.mrf.mxu0
  %v311 = vadd.f32 0.0, %v310
  %v312 = vpop.f32.mrf.mxu0
  %v313 = vadd.f32 0.0, %v312
  %314 = vdwg.mxu0
  %315 = vmatpush.bf16.msra.mxu0 0
  %316 = vmatpush.bf16.msra.mxu0 0
  %317 = vmatpush.bf16.msra.mxu0 0
  %318 = vmatpush.bf16.msra.mxu0 %v212
  %319 = vmatpush.bf16.msra.mxu0 %v157
  %320 = vmatpush.bf16.msra.mxu0 %v153
  %321 = vmatpush.bf16.msra.mxu0 %v149
  %322 = vmatpush.bf16.msra.mxu0 %v145
  %323 = vmatmul.bf16.gmra.mxu0 %v181
  %v324 = vpop.f32.mrf.mxu0
  %v325 = vadd.f32 0.0, %v324
  %v326 = vpop.f32.mrf.mxu0
  %v327 = vadd.f32 0.0, %v326
  %328 = vmatmul.bf16.gmra.mxu0 %v184
  %v329 = vpop.f32.mrf.mxu0
  %v330 = vadd.f32 0.0, %v329
  %v331 = vpop.f32.mrf.mxu0
  %v332 = vadd.f32 0.0, %v331
  %333 = vmatmul.bf16.gmra.mxu0 %v187
  %v334 = vpop.f32.mrf.mxu0
  %v335 = vadd.f32 0.0, %v334
  %v336 = vpop.f32.mrf.mxu0
  %v337 = vadd.f32 0.0, %v336
  %338 = vmatmul.bf16.gmra.mxu0 %v190
  %v339 = vpop.f32.mrf.mxu0
  %v340 = vadd.f32 0.0, %v339
  %v341 = vpop.f32.mrf.mxu0
  %v342 = vadd.f32 0.0, %v341
  %343 = vmatmul.bf16.gmra.mxu0 %v193
  %v344 = vpop.f32.mrf.mxu0
  %v345 = vadd.f32 0.0, %v344
  %v346 = vpop.f32.mrf.mxu0
  %v347 = vadd.f32 0.0, %v346
  %348 = vmatmul.bf16.gmra.mxu0 %v196
  %v349 = vpop.f32.mrf.mxu0
  %v350 = vadd.f32 0.0, %v349
  %v351 = vpop.f32.mrf.mxu0
  %v352 = vadd.f32 0.0, %v351
  %353 = vmatmul.bf16.gmra.mxu0 %v199
  %v354 = vpop.f32.mrf.mxu0
  %v355 = vadd.f32 0.0, %v354
  %v356 = vpop.f32.mrf.mxu0
  %v357 = vadd.f32 0.0, %v356
  %358 = vmatmul.bf16.gmra.mxu0 %v202
  %v359 = vpop.f32.mrf.mxu0
  %v360 = vadd.f32 0.0, %v359
  %v361 = vpop.f32.mrf.mxu0
  %v362 = vadd.f32 0.0, %v361
  %363 = vdwg.mxu0
  %364 = vmatpush.bf16.msra.mxu0 0
  %365 = vmatpush.bf16.msra.mxu0 0
  %366 = vmatpush.bf16.msra.mxu0 0
  %367 = vmatpush.bf16.msra.mxu0 %v215
  %368 = vmatpush.bf16.msra.mxu0 %v158
  %369 = vmatpush.bf16.msra.mxu0 %v154
  %370 = vmatpush.bf16.msra.mxu0 %v150
  %371 = vmatpush.bf16.msra.mxu0 %v146
  %372 = vmatmul.bf16.gmra.mxu0 %v181
  %v373 = vpop.f32.mrf.mxu0
  %v374 = vadd.f32 0.0, %v373
  %v375 = vpop.f32.mrf.mxu0
  %v376 = vadd.f32 0.0, %v375
  %377 = vmatmul.bf16.gmra.mxu0 %v184
  %v378 = vpop.f32.mrf.mxu0
  %v379 = vadd.f32 0.0, %v378
  %v380 = vpop.f32.mrf.mxu0
  %v381 = vadd.f32 0.0, %v380
  %382 = vmatmul.bf16.gmra.mxu0 %v187
  %v383 = vpop.f32.mrf.mxu0
  %v384 = vadd.f32 0.0, %v383
  %v385 = vpop.f32.mrf.mxu0
  %v386 = vadd.f32 0.0, %v385
  %387 = vmatmul.bf16.gmra.mxu0 %v190
  %v388 = vpop.f32.mrf.mxu0
  %v389 = vadd.f32 0.0, %v388
  %v390 = vpop.f32.mrf.mxu0
  %v391 = vadd.f32 0.0, %v390
  %392 = vmatmul.bf16.gmra.mxu0 %v193
  %v393 = vpop.f32.mrf.mxu0
  %v394 = vadd.f32 0.0, %v393
  %v395 = vpop.f32.mrf.mxu0
  %v396 = vadd.f32 0.0, %v395
  %397 = vmatmul.bf16.gmra.mxu0 %v196
  %v398 = vpop.f32.mrf.mxu0
  %v399 = vadd.f32 0.0, %v398
  %v400 = vpop.f32.mrf.mxu0
  %v401 = vadd.f32 0.0, %v400
  %402 = vmatmul.bf16.gmra.mxu0 %v199
  %v403 = vpop.f32.mrf.mxu0
  %v404 = vadd.f32 0.0, %v403
  %v405 = vpop.f32.mrf.mxu0
  %v406 = vadd.f32 0.0, %v405
  %407 = vmatmul.bf16.gmra.mxu0 %v202
  %v408 = vpop.f32.mrf.mxu0
  %v409 = vadd.f32 0.0, %v408
  %v410 = vpop.f32.mrf.mxu0
  %v411 = vadd.f32 0.0, %v410
  %412 = vdwg.mxu0
  %v413 = vpack.c.bf16 %v276, %v227
  %v414 = vpack.c.bf16 %v374, %v325
  %v415 = vpack.c.bf16 %v278, %v229
  %v416 = vpack.c.bf16 %v376, %v327
  %v417 = vpack.c.bf16 %v281, %v232
  %v418 = vpack.c.bf16 %v379, %v330
  %v419 = vpack.c.bf16 %v283, %v234
  %v420 = vpack.c.bf16 %v381, %v332
  %v421 = vpack.c.bf16 %v286, %v237
  %v422 = vpack.c.bf16 %v384, %v335
  %v423 = vpack.c.bf16 %v288, %v239
  %v424 = vpack.c.bf16 %v386, %v337
  %v425 = vpack.c.bf16 %v291, %v242
  %v426 = vpack.c.bf16 %v389, %v340
  %v427 = vpack.c.bf16 %v293, %v244
  %v428 = vpack.c.bf16 %v391, %v342
  %v429 = vpack.c.bf16 %v296, %v247
  %v430 = vpack.c.bf16 %v394, %v345
  %v431 = vpack.c.bf16 %v298, %v249
  %v432 = vpack.c.bf16 %v396, %v347
  %v433 = vpack.c.bf16 %v301, %v252
  %v434 = vpack.c.bf16 %v399, %v350
  %v435 = vpack.c.bf16 %v303, %v254
  %v436 = vpack.c.bf16 %v401, %v352
  %v437 = vpack.c.bf16 %v306, %v257
  %v438 = vpack.c.bf16 %v404, %v355
  %v439 = vpack.c.bf16 %v308, %v259
  %v440 = vpack.c.bf16 %v406, %v357
  %v441 = vpack.c.bf16 %v311, %v262
  %v442 = vpack.c.bf16 %v409, %v360
  %v443 = vpack.c.bf16 %v313, %v264
  %v444 = vpack.c.bf16 %v411, %v362
  %445 = vst [vmem:[%s2] sm:$0xff] %v413
  %446 = vst [vmem:[%s2 + $0x8] sm:$0xff] %v414
  %447 = vst [vmem:[%s2 + $0x10] sm:$0xff] %v415
  %448 = vst [vmem:[%s2 + $0x18] sm:$0xff] %v416
  %449 = vst [vmem:[%s2 + $0x20] sm:$0xff] %v417
  %450 = vst [vmem:[%s2 + $0x28] sm:$0xff] %v418
  %451 = vst [vmem:[%s2 + $0x30] sm:$0xff] %v419
  %452 = vst [vmem:[%s2 + $0x38] sm:$0xff] %v420
  %453 = vst [vmem:[%s2 + $0x40] sm:$0xff] %v421
  %454 = vst [vmem:[%s2 + $0x48] sm:$0xff] %v422
  %455 = vst [vmem:[%s2 + $0x50] sm:$0xff] %v423
  %456 = vst [vmem:[%s2 + $0x58] sm:$0xff] %v424
  %457 = vst [vmem:[%s2 + $0x60] sm:$0xff] %v425
  %458 = vst [vmem:[%s2 + $0x68] sm:$0xff] %v426
  %459 = vst [vmem:[%s2 + $0x70] sm:$0xff] %v427
  %460 = vst [vmem:[%s2 + $0x78] sm:$0xff] %v428
  %461 = vst [vmem:[%s2 + $0x80] sm:$0xff] %v429
  %462 = vst [vmem:[%s2 + $0x88] sm:$0xff] %v430
  %463 = vst [vmem:[%s2 + $0x90] sm:$0xff] %v431
  %464 = vst [vmem:[%s2 + $0x98] sm:$0xff] %v432
  %465 = vst [vmem:[%s2 + $0xa0] sm:$0xff] %v433
  %466 = vst [vmem:[%s2 + $0xa8] sm:$0xff] %v434
  %467 = vst [vmem:[%s2 + $0xb0] sm:$0xff] %v435
  %468 = vst [vmem:[%s2 + $0xb8] sm:$0xff] %v436
  %469 = vst [vmem:[%s2 + $0xc0] sm:$0xff] %v437
  %470 = vst [vmem:[%s2 + $0xc8] sm:$0xff] %v438
  %471 = vst [vmem:[%s2 + $0xd0] sm:$0xff] %v439
  %472 = vst [vmem:[%s2 + $0xd8] sm:$0xff] %v440
  %473 = vst [vmem:[%s2 + $0xe0] sm:$0xff] %v441
  %474 = vst [vmem:[%s2 + $0xe8] sm:$0xff] %v442
  %475 = vst [vmem:[%s2 + $0xf0] sm:$0xff] %v443
  %476 = vst [vmem:[%s2 + $0xf8] sm:$0xff] %v444
  %v477 = vadd.f32 %v227, %v229
  %v478 = vadd.f32 %v477, %v232
  %v479 = vadd.f32 %v478, %v234
  %v480 = vadd.f32 %v479, %v237
  %v481 = vadd.f32 %v480, %v239
  %v482 = vadd.f32 %v481, %v242
  %v483 = vadd.f32 %v482, %v244
  %v484 = vadd.f32 %v483, %v247
  %v485 = vadd.f32 %v484, %v249
  %v486 = vadd.f32 %v485, %v252
  %v487 = vadd.f32 %v486, %v254
  %v488 = vadd.f32 %v487, %v257
  %v489 = vadd.f32 %v488, %v259
  %v490 = vadd.f32 %v489, %v262
  %v491 = vadd.f32 %v490, %v264
  %v492 = vrot.slane %v491, 4
  %v493 = vadd.f32 %v491, %v492
  %v494 = vrot.slane %v493, 2
  %v495 = vadd.f32 %v493, %v494
  %v496 = vrot.slane %v495, 1
  %v497 = vadd.f32 %v495, %v496
  %v498 = vadd.f32 %v276, %v278
  %v499 = vadd.f32 %v498, %v281
  %v500 = vadd.f32 %v499, %v283
  %v501 = vadd.f32 %v500, %v286
  %v502 = vadd.f32 %v501, %v288
  %v503 = vadd.f32 %v502, %v291
  %v504 = vadd.f32 %v503, %v293
  %v505 = vadd.f32 %v504, %v296
  %v506 = vadd.f32 %v505, %v298
  %v507 = vadd.f32 %v506, %v301
  %v508 = vadd.f32 %v507, %v303
  %v509 = vadd.f32 %v508, %v306
  %v510 = vadd.f32 %v509, %v308
  %v511 = vadd.f32 %v510, %v311
  %v512 = vadd.f32 %v511, %v313
  %v513 = vrot.slane %v512, 4
  %v514 = vadd.f32 %v512, %v513
  %v515 = vrot.slane %v514, 2
  %v516 = vadd.f32 %v514, %v515
  %v517 = vrot.slane %v516, 1
  %v518 = vadd.f32 %v516, %v517
  %v519 = vadd.f32 %v325, %v327
  %v520 = vadd.f32 %v519, %v330
  %v521 = vadd.f32 %v520, %v332
  %v522 = vadd.f32 %v521, %v335
  %v523 = vadd.f32 %v522, %v337
  %v524 = vadd.f32 %v523, %v340
  %v525 = vadd.f32 %v524, %v342
  %v526 = vadd.f32 %v525, %v345
  %v527 = vadd.f32 %v526, %v347
  %v528 = vadd.f32 %v527, %v350
  %v529 = vadd.f32 %v528, %v352
  %v530 = vadd.f32 %v529, %v355
  %v531 = vadd.f32 %v530, %v357
  %v532 = vadd.f32 %v531, %v360
  %v533 = vadd.f32 %v532, %v362
  %v534 = vrot.slane %v533, 4
  %v535 = vadd.f32 %v533, %v534
  %v536 = vrot.slane %v535, 2
  %v537 = vadd.f32 %v535, %v536
  %v538 = vrot.slane %v537, 1
  %v539 = vadd.f32 %v537, %v538
  %v540 = vadd.f32 %v374, %v376
  %v541 = vadd.f32 %v540, %v379
  %v542 = vadd.f32 %v541, %v381
  %v543 = vadd.f32 %v542, %v384
  %v544 = vadd.f32 %v543, %v386
  %v545 = vadd.f32 %v544, %v389
  %v546 = vadd.f32 %v545, %v391
  %v547 = vadd.f32 %v546, %v394
  %v548 = vadd.f32 %v547, %v396
  %v549 = vadd.f32 %v548, %v399
  %v550 = vadd.f32 %v549, %v401
  %v551 = vadd.f32 %v550, %v404
  %v552 = vadd.f32 %v551, %v406
  %v553 = vadd.f32 %v552, %v409
  %v554 = vadd.f32 %v553, %v411
  %v555 = vrot.slane %v554, 4
  %v556 = vadd.f32 %v554, %v555
  %v557 = vrot.slane %v556, 2
  %v558 = vadd.f32 %v556, %v557
  %v559 = vrot.slane %v558, 1
  %v560 = vadd.f32 %v558, %v559
  %v565 = vrot.slane %v518, 7
  %v566 = vrot.slane %v539, 6
  %v567 = vrot.slane %v560, 5
  %vm568 = vcmask 1040384
  %v569 = vsel %vm568, %v497, %v565
  %vm570 = vcmask 1042434
  %v571 = vsel %vm570, %v566, %v567
  %vm572 = vcmask 1041408
  %v573 = vsel %vm572, %v569, %v571
  %v575 = vlaneseq
  %vm576 = vcmp.ge.s32.totalorder %v575, 0
  %vm577 = vcmp.lt.s32.totalorder %v575, 512
  %vm578 = vmand %vm576, %vm577
  %579 = vst.msk [vmem:[%s3] sm:$0xf] %vm578, %v573
  %v580 = vmul.f32 %v227, %v227
  %v581 = vmul.f32 %v276, %v276
  %v582 = vmul.f32 %v325, %v325
  %v583 = vmul.f32 %v374, %v374
  %v584 = vmul.f32 %v229, %v229
  %v585 = vmul.f32 %v278, %v278
  %v586 = vmul.f32 %v327, %v327
  %v587 = vmul.f32 %v376, %v376
  %v588 = vmul.f32 %v232, %v232
  %v589 = vmul.f32 %v281, %v281
  %v590 = vmul.f32 %v330, %v330
  %v591 = vmul.f32 %v379, %v379
  %v592 = vmul.f32 %v234, %v234
  %v593 = vmul.f32 %v283, %v283
  %v594 = vmul.f32 %v332, %v332
  %v595 = vmul.f32 %v381, %v381
  %v596 = vmul.f32 %v237, %v237
  %v597 = vmul.f32 %v286, %v286
  %v598 = vmul.f32 %v335, %v335
  %v599 = vmul.f32 %v384, %v384
  %v600 = vmul.f32 %v239, %v239
  %v601 = vmul.f32 %v288, %v288
  %v602 = vmul.f32 %v337, %v337
  %v603 = vmul.f32 %v386, %v386
  %v604 = vmul.f32 %v242, %v242
  %v605 = vmul.f32 %v291, %v291
  %v606 = vmul.f32 %v340, %v340
  %v607 = vmul.f32 %v389, %v389
  %v608 = vmul.f32 %v244, %v244
  %v609 = vmul.f32 %v293, %v293
  %v610 = vmul.f32 %v342, %v342
  %v611 = vmul.f32 %v391, %v391
  %v612 = vmul.f32 %v247, %v247
  %v613 = vmul.f32 %v296, %v296
  %v614 = vmul.f32 %v345, %v345
  %v615 = vmul.f32 %v394, %v394
  %v616 = vmul.f32 %v249, %v249
  %v617 = vmul.f32 %v298, %v298
  %v618 = vmul.f32 %v347, %v347
  %v619 = vmul.f32 %v396, %v396
  %v620 = vmul.f32 %v252, %v252
  %v621 = vmul.f32 %v301, %v301
  %v622 = vmul.f32 %v350, %v350
  %v623 = vmul.f32 %v399, %v399
  %v624 = vmul.f32 %v254, %v254
  %v625 = vmul.f32 %v303, %v303
  %v626 = vmul.f32 %v352, %v352
  %v627 = vmul.f32 %v401, %v401
  %v628 = vmul.f32 %v257, %v257
  %v629 = vmul.f32 %v306, %v306
  %v630 = vmul.f32 %v355, %v355
  %v631 = vmul.f32 %v404, %v404
  %v632 = vmul.f32 %v259, %v259
  %v633 = vmul.f32 %v308, %v308
  %v634 = vmul.f32 %v357, %v357
  %v635 = vmul.f32 %v406, %v406
  %v636 = vmul.f32 %v262, %v262
  %v637 = vmul.f32 %v311, %v311
  %v638 = vmul.f32 %v360, %v360
  %v639 = vmul.f32 %v409, %v409
  %v640 = vmul.f32 %v264, %v264
  %v641 = vmul.f32 %v313, %v313
  %v642 = vmul.f32 %v362, %v362
  %v643 = vmul.f32 %v411, %v411
  %v644 = vadd.f32 %v580, %v584
  %v645 = vadd.f32 %v644, %v588
  %v646 = vadd.f32 %v645, %v592
  %v647 = vadd.f32 %v646, %v596
  %v648 = vadd.f32 %v647, %v600
  %v649 = vadd.f32 %v648, %v604
  %v650 = vadd.f32 %v649, %v608
  %v651 = vadd.f32 %v650, %v612
  %v652 = vadd.f32 %v651, %v616
  %v653 = vadd.f32 %v652, %v620
  %v654 = vadd.f32 %v653, %v624
  %v655 = vadd.f32 %v654, %v628
  %v656 = vadd.f32 %v655, %v632
  %v657 = vadd.f32 %v656, %v636
  %v658 = vadd.f32 %v657, %v640
  %v659 = vrot.slane %v658, 4
  %v660 = vadd.f32 %v658, %v659
  %v661 = vrot.slane %v660, 2
  %v662 = vadd.f32 %v660, %v661
  %v663 = vrot.slane %v662, 1
  %v664 = vadd.f32 %v662, %v663
  %v665 = vadd.f32 %v581, %v585
  %v666 = vadd.f32 %v665, %v589
  %v667 = vadd.f32 %v666, %v593
  %v668 = vadd.f32 %v667, %v597
  %v669 = vadd.f32 %v668, %v601
  %v670 = vadd.f32 %v669, %v605
  %v671 = vadd.f32 %v670, %v609
  %v672 = vadd.f32 %v671, %v613
  %v673 = vadd.f32 %v672, %v617
  %v674 = vadd.f32 %v673, %v621
  %v675 = vadd.f32 %v674, %v625
  %v676 = vadd.f32 %v675, %v629
  %v677 = vadd.f32 %v676, %v633
  %v678 = vadd.f32 %v677, %v637
  %v679 = vadd.f32 %v678, %v641
  %v680 = vrot.slane %v679, 4
  %v681 = vadd.f32 %v679, %v680
  %v682 = vrot.slane %v681, 2
  %v683 = vadd.f32 %v681, %v682
  %v684 = vrot.slane %v683, 1
  %v685 = vadd.f32 %v683, %v684
  %v686 = vadd.f32 %v582, %v586
  %v687 = vadd.f32 %v686, %v590
  %v688 = vadd.f32 %v687, %v594
  %v689 = vadd.f32 %v688, %v598
  %v690 = vadd.f32 %v689, %v602
  %v691 = vadd.f32 %v690, %v606
  %v692 = vadd.f32 %v691, %v610
  %v693 = vadd.f32 %v692, %v614
  %v694 = vadd.f32 %v693, %v618
  %v695 = vadd.f32 %v694, %v622
  %v696 = vadd.f32 %v695, %v626
  %v697 = vadd.f32 %v696, %v630
  %v698 = vadd.f32 %v697, %v634
  %v699 = vadd.f32 %v698, %v638
  %v700 = vadd.f32 %v699, %v642
  %v701 = vrot.slane %v700, 4
  %v702 = vadd.f32 %v700, %v701
  %v703 = vrot.slane %v702, 2
  %v704 = vadd.f32 %v702, %v703
  %v705 = vrot.slane %v704, 1
  %v706 = vadd.f32 %v704, %v705
  %v707 = vadd.f32 %v583, %v587
  %v708 = vadd.f32 %v707, %v591
  %v709 = vadd.f32 %v708, %v595
  %v710 = vadd.f32 %v709, %v599
  %v711 = vadd.f32 %v710, %v603
  %v712 = vadd.f32 %v711, %v607
  %v713 = vadd.f32 %v712, %v611
  %v714 = vadd.f32 %v713, %v615
  %v715 = vadd.f32 %v714, %v619
  %v716 = vadd.f32 %v715, %v623
  %v717 = vadd.f32 %v716, %v627
  %v718 = vadd.f32 %v717, %v631
  %v719 = vadd.f32 %v718, %v635
  %v720 = vadd.f32 %v719, %v639
  %v721 = vadd.f32 %v720, %v643
  %v722 = vrot.slane %v721, 4
  %v723 = vadd.f32 %v721, %v722
  %v724 = vrot.slane %v723, 2
  %v725 = vadd.f32 %v723, %v724
  %v726 = vrot.slane %v725, 1
  %v727 = vadd.f32 %v725, %v726
  %v732 = vrot.slane %v685, 7
  %v733 = vrot.slane %v706, 6
  %v734 = vrot.slane %v727, 5
  %v735 = vsel %vm568, %v664, %v732
  %v736 = vsel %vm570, %v733, %v734
  %v737 = vsel %vm572, %v735, %v736
  %739 = vst.msk [vmem:[%s4] sm:$0xf] %vm578, %v737
  // Predicated region
  $region10: #{unet_innermost_forward.4} parent=0 // pred_check
    _
  $region11: #{unet_innermost_forward.4} parent=0 // pred_check_branch
    %741 = sbr.rel (0) target = $region13
  $region12: #{unet_innermost_forward.4} parent=0 // pred_region
    _
  $region13: #{unet_innermost_forward.4} parent=0 // pred_fallthru
    _
  // Predicated region
  $region14: #{unet_innermost_forward.4} parent=0 // pred_check
    _
  $region15: #{unet_innermost_forward.4} parent=0 // pred_check_branch
    %743 = sbr.rel (0) target = $region17
  $region16: #{unet_innermost_forward.4} parent=0 // pred_region
    _
  $region17: #{unet_innermost_forward.4} parent=0 // pred_fallthru
    _
  // Predicated region
  $region18: #{unet_innermost_forward.4} parent=0 // pred_check
    _
  $region19: #{unet_innermost_forward.4} parent=0 // pred_check_branch
    %745 = sbr.rel (0) target = $region21
  $region20: #{unet_innermost_forward.4} parent=0 // pred_region
    _
  $region21: #{unet_innermost_forward.4} parent=0 // pred_fallthru
    _
  // Predicated region
  $region22: #{unet_innermost_forward.4} parent=0 // pred_check
    _
  $region23: #{unet_innermost_forward.4} parent=0 // pred_check_branch
    %747 = sbr.rel (0) target = $region25
  $region24: #{unet_innermost_forward.4} parent=0 // pred_region
    _
  $region25: #{unet_innermost_forward.4} parent=0 // pred_fallthru
    _
  // Predicated region
  $region26: #{unet_innermost_forward.4} parent=0 // pred_check
    _
  $region27: #{unet_innermost_forward.4} parent=0 // pred_check_branch
    %749 = sbr.rel (0) target = $region29
  $region28: #{unet_innermost_forward.4} parent=0 // pred_region
    _
  $region29: #{unet_innermost_forward.4} parent=0 // pred_fallthru
    _
  // Predicated region
  $region30: #{unet_innermost_forward.4} parent=0 // pred_check
    _
  $region31: #{unet_innermost_forward.4} parent=0 // pred_check_branch
    %751 = sbr.rel (0) target = $region33
  $region32: #{unet_innermost_forward.4} parent=0 // pred_region
    _
  $region33: #{unet_innermost_forward.4} parent=0 // pred_fallthru
    _

// kernel: unet_innermost_forward.5
$region0: #{unet_innermost_forward.5}
  #allocation0 [shape = 'u32[]', space=smem, size = 0x4, offset = 0x4, fixed_abs, tag = 'smem constant byte address 0x4 - core index']
  #allocation1 [shape = 'u32[72,128]{1,0:T(1,128)}', space=vmem, size = 0x9000, scoped, tag = 'internal scratch']
  %s0 = inlined_call_operand.vmem [shape: bf16[128,512], index: 0, kind: input, shape index: {}]
  %s1 = inlined_call_operand.vmem [shape: f32[1,512], index: 1, kind: input, shape index: {}]
  %s2 = inlined_call_operand.vmem [shape: f32[1,512], index: 2, kind: input, shape index: {}]
  %s3 = inlined_call_operand.vmem [shape: f32[128,512], index: 3, kind: output, shape index: {}]
  %s4 = sld [smem:[#allocation0]]
  $region22: #{unet_innermost_forward.5} parent=0
    _
  %s6 = ssub.s32 1, %s4
  %s7 = scalar_select 0, %s6, %s4
  // Predicated region
  $region2: #{unet_innermost_forward.5} parent=0 // pred_check
    _
  $region3: #{unet_innermost_forward.5} parent=0 // pred_check_branch
    %9 = sbr.rel (0) target = $region5
  $region4: #{unet_innermost_forward.5} parent=0 // pred_region
    _
  $region5: #{unet_innermost_forward.5} parent=0 // pred_fallthru
    _
  // Predicated region
  $region6: #{unet_innermost_forward.5} parent=0 // pred_check
    _
  $region7: #{unet_innermost_forward.5} parent=0 // pred_check_branch
    %11 = sbr.rel (0) target = $region9
  $region8: #{unet_innermost_forward.5} parent=0 // pred_region
    _
  $region9: #{unet_innermost_forward.5} parent=0 // pred_fallthru
    _
  // Predicated region
  $region10: #{unet_innermost_forward.5} parent=0 // pred_check
    _
  $region11: #{unet_innermost_forward.5} parent=0 // pred_check_branch
    %13 = sbr.rel (0) target = $region13
  $region12: #{unet_innermost_forward.5} parent=0 // pred_region
    _
  $region13: #{unet_innermost_forward.5} parent=0 // pred_fallthru
    _
  %v14 = vld [vmem:[%s0] sm:$0xff]
  %v15 = vld [vmem:[%s0 + $0x8] sm:$0xff]
  %v16 = vld [vmem:[%s0 + $0x10] sm:$0xff]
  %v17 = vld [vmem:[%s0 + $0x18] sm:$0xff]
  %v18 = vld [vmem:[%s0 + $0x20] sm:$0xff]
  %v19 = vld [vmem:[%s0 + $0x28] sm:$0xff]
  %v20 = vld [vmem:[%s0 + $0x30] sm:$0xff]
  %v21 = vld [vmem:[%s0 + $0x38] sm:$0xff]
  %v22 = vld [vmem:[%s0 + $0x40] sm:$0xff]
  %v23 = vld [vmem:[%s0 + $0x48] sm:$0xff]
  %v24 = vld [vmem:[%s0 + $0x50] sm:$0xff]
  %v25 = vld [vmem:[%s0 + $0x58] sm:$0xff]
  %v26 = vld [vmem:[%s0 + $0x60] sm:$0xff]
  %v27 = vld [vmem:[%s0 + $0x68] sm:$0xff]
  %v28 = vld [vmem:[%s0 + $0x70] sm:$0xff]
  %v29 = vld [vmem:[%s0 + $0x78] sm:$0xff]
  %v30 = vld [vmem:[%s0 + $0x80] sm:$0xff]
  %v31 = vld [vmem:[%s0 + $0x88] sm:$0xff]
  %v32 = vld [vmem:[%s0 + $0x90] sm:$0xff]
  %v33 = vld [vmem:[%s0 + $0x98] sm:$0xff]
  %v34 = vld [vmem:[%s0 + $0xa0] sm:$0xff]
  %v35 = vld [vmem:[%s0 + $0xa8] sm:$0xff]
  %v36 = vld [vmem:[%s0 + $0xb0] sm:$0xff]
  %v37 = vld [vmem:[%s0 + $0xb8] sm:$0xff]
  %v38 = vld [vmem:[%s0 + $0xc0] sm:$0xff]
  %v39 = vld [vmem:[%s0 + $0xc8] sm:$0xff]
  %v40 = vld [vmem:[%s0 + $0xd0] sm:$0xff]
  %v41 = vld [vmem:[%s0 + $0xd8] sm:$0xff]
  %v42 = vld [vmem:[%s0 + $0xe0] sm:$0xff]
  %v43 = vld [vmem:[%s0 + $0xe8] sm:$0xff]
  %v44 = vld [vmem:[%s0 + $0xf0] sm:$0xff]
  %v45 = vld [vmem:[%s0 + $0xf8] sm:$0xff]
  %v46 = vunpack.c.l.bf16 %v14
  %v47 = vunpack.c.h.bf16 %v14
  %v48 = vunpack.c.l.bf16 %v15
  %v49 = vunpack.c.h.bf16 %v15
  %v50 = vunpack.c.l.bf16 %v16
  %v51 = vunpack.c.h.bf16 %v16
  %v52 = vunpack.c.l.bf16 %v17
  %v53 = vunpack.c.h.bf16 %v17
  %v54 = vunpack.c.l.bf16 %v18
  %v55 = vunpack.c.h.bf16 %v18
  %v56 = vunpack.c.l.bf16 %v19
  %v57 = vunpack.c.h.bf16 %v19
  %v58 = vunpack.c.l.bf16 %v20
  %v59 = vunpack.c.h.bf16 %v20
  %v60 = vunpack.c.l.bf16 %v21
  %v61 = vunpack.c.h.bf16 %v21
  %v62 = vunpack.c.l.bf16 %v22
  %v63 = vunpack.c.h.bf16 %v22
  %v64 = vunpack.c.l.bf16 %v23
  %v65 = vunpack.c.h.bf16 %v23
  %v66 = vunpack.c.l.bf16 %v24
  %v67 = vunpack.c.h.bf16 %v24
  %v68 = vunpack.c.l.bf16 %v25
  %v69 = vunpack.c.h.bf16 %v25
  %v70 = vunpack.c.l.bf16 %v26
  %v71 = vunpack.c.h.bf16 %v26
  %v72 = vunpack.c.l.bf16 %v27
  %v73 = vunpack.c.h.bf16 %v27
  %v74 = vunpack.c.l.bf16 %v28
  %v75 = vunpack.c.h.bf16 %v28
  %v76 = vunpack.c.l.bf16 %v29
  %v77 = vunpack.c.h.bf16 %v29
  %v78 = vunpack.c.l.bf16 %v30
  %v79 = vunpack.c.h.bf16 %v30
  %v80 = vunpack.c.l.bf16 %v31
  %v81 = vunpack.c.h.bf16 %v31
  %v82 = vunpack.c.l.bf16 %v32
  %v83 = vunpack.c.h.bf16 %v32
  %v84 = vunpack.c.l.bf16 %v33
  %v85 = vunpack.c.h.bf16 %v33
  %v86 = vunpack.c.l.bf16 %v34
  %v87 = vunpack.c.h.bf16 %v34
  %v88 = vunpack.c.l.bf16 %v35
  %v89 = vunpack.c.h.bf16 %v35
  %v90 = vunpack.c.l.bf16 %v36
  %v91 = vunpack.c.h.bf16 %v36
  %v92 = vunpack.c.l.bf16 %v37
  %v93 = vunpack.c.h.bf16 %v37
  %v94 = vunpack.c.l.bf16 %v38
  %v95 = vunpack.c.h.bf16 %v38
  %v96 = vunpack.c.l.bf16 %v39
  %v97 = vunpack.c.h.bf16 %v39
  %v98 = vunpack.c.l.bf16 %v40
  %v99 = vunpack.c.h.bf16 %v40
  %v100 = vunpack.c.l.bf16 %v41
  %v101 = vunpack.c.h.bf16 %v41
  %v102 = vunpack.c.l.bf16 %v42
  %v103 = vunpack.c.h.bf16 %v42
  %v104 = vunpack.c.l.bf16 %v43
  %v105 = vunpack.c.h.bf16 %v43
  %v106 = vunpack.c.l.bf16 %v44
  %v107 = vunpack.c.h.bf16 %v44
  %v108 = vunpack.c.l.bf16 %v45
  %v109 = vunpack.c.h.bf16 %v45
  %v110 = vld [vmem:[%s1] sm:$0xf]
  %v112 = vperm.slane %v110, 0
  %v113 = vperm.slane %v110, 1
  %v114 = vperm.slane %v110, 2
  %v115 = vperm.slane %v110, 3
  %v120 = vmul.f32 %v46, %v112
  %v121 = vmul.f32 %v47, %v113
  %v122 = vmul.f32 %v48, %v114
  %v123 = vmul.f32 %v49, %v115
  %v124 = vmul.f32 %v50, %v112
  %v125 = vmul.f32 %v51, %v113
  %v126 = vmul.f32 %v52, %v114
  %v127 = vmul.f32 %v53, %v115
  %v128 = vmul.f32 %v54, %v112
  %v129 = vmul.f32 %v55, %v113
  %v130 = vmul.f32 %v56, %v114
  %v131 = vmul.f32 %v57, %v115
  %v132 = vmul.f32 %v58, %v112
  %v133 = vmul.f32 %v59, %v113
  %v134 = vmul.f32 %v60, %v114
  %v135 = vmul.f32 %v61, %v115
  %v136 = vmul.f32 %v62, %v112
  %v137 = vmul.f32 %v63, %v113
  %v138 = vmul.f32 %v64, %v114
  %v139 = vmul.f32 %v65, %v115
  %v140 = vmul.f32 %v66, %v112
  %v141 = vmul.f32 %v67, %v113
  %v142 = vmul.f32 %v68, %v114
  %v143 = vmul.f32 %v69, %v115
  %v144 = vmul.f32 %v70, %v112
  %v145 = vmul.f32 %v71, %v113
  %v146 = vmul.f32 %v72, %v114
  %v147 = vmul.f32 %v73, %v115
  %v148 = vmul.f32 %v74, %v112
  %v149 = vmul.f32 %v75, %v113
  %v150 = vmul.f32 %v76, %v114
  %v151 = vmul.f32 %v77, %v115
  %v152 = vmul.f32 %v78, %v112
  %v153 = vmul.f32 %v79, %v113
  %v154 = vmul.f32 %v80, %v114
  %v155 = vmul.f32 %v81, %v115
  %v156 = vmul.f32 %v82, %v112
  %v157 = vmul.f32 %v83, %v113
  %v158 = vmul.f32 %v84, %v114
  %v159 = vmul.f32 %v85, %v115
  %v160 = vmul.f32 %v86, %v112
  %v161 = vmul.f32 %v87, %v113
  %v162 = vmul.f32 %v88, %v114
  %v163 = vmul.f32 %v89, %v115
  %v164 = vmul.f32 %v90, %v112
  %v165 = vmul.f32 %v91, %v113
  %v166 = vmul.f32 %v92, %v114
  %v167 = vmul.f32 %v93, %v115
  %v168 = vmul.f32 %v94, %v112
  %v169 = vmul.f32 %v95, %v113
  %v170 = vmul.f32 %v96, %v114
  %v171 = vmul.f32 %v97, %v115
  %v172 = vmul.f32 %v98, %v112
  %v173 = vmul.f32 %v99, %v113
  %v174 = vmul.f32 %v100, %v114
  %v175 = vmul.f32 %v101, %v115
  %v176 = vmul.f32 %v102, %v112
  %v177 = vmul.f32 %v103, %v113
  %v178 = vmul.f32 %v104, %v114
  %v179 = vmul.f32 %v105, %v115
  %v180 = vmul.f32 %v106, %v112
  %v181 = vmul.f32 %v107, %v113
  %v182 = vmul.f32 %v108, %v114
  %v183 = vmul.f32 %v109, %v115
  %v184 = vld [vmem:[%s2] sm:$0xf]
  %v186 = vperm.slane %v184, 0
  %v187 = vperm.slane %v184, 1
  %v188 = vperm.slane %v184, 2
  %v189 = vperm.slane %v184, 3
  %v194 = vadd.f32 %v120, %v186
  %v195 = vadd.f32 %v121, %v187
  %v196 = vadd.f32 %v122, %v188
  %v197 = vadd.f32 %v123, %v189
  %v198 = vadd.f32 %v124, %v186
  %v199 = vadd.f32 %v125, %v187
  %v200 = vadd.f32 %v126, %v188
  %v201 = vadd.f32 %v127, %v189
  %v202 = vadd.f32 %v128, %v186
  %v203 = vadd.f32 %v129, %v187
  %v204 = vadd.f32 %v130, %v188
  %v205 = vadd.f32 %v131, %v189
  %v206 = vadd.f32 %v132, %v186
  %v207 = vadd.f32 %v133, %v187
  %v208 = vadd.f32 %v134, %v188
  %v209 = vadd.f32 %v135, %v189
  %v210 = vadd.f32 %v136, %v186
  %v211 = vadd.f32 %v137, %v187
  %v212 = vadd.f32 %v138, %v188
  %v213 = vadd.f32 %v139, %v189
  %v214 = vadd.f32 %v140, %v186
  %v215 = vadd.f32 %v141, %v187
  %v216 = vadd.f32 %v142, %v188
  %v217 = vadd.f32 %v143, %v189
  %v218 = vadd.f32 %v144, %v186
  %v219 = vadd.f32 %v145, %v187
  %v220 = vadd.f32 %v146, %v188
  %v221 = vadd.f32 %v147, %v189
  %v222 = vadd.f32 %v148, %v186
  %v223 = vadd.f32 %v149, %v187
  %v224 = vadd.f32 %v150, %v188
  %v225 = vadd.f32 %v151, %v189
  %v226 = vadd.f32 %v152, %v186
  %v227 = vadd.f32 %v153, %v187
  %v228 = vadd.f32 %v154, %v188
  %v229 = vadd.f32 %v155, %v189
  %v230 = vadd.f32 %v156, %v186
  %v231 = vadd.f32 %v157, %v187
  %v232 = vadd.f32 %v158, %v188
  %v233 = vadd.f32 %v159, %v189
  %v234 = vadd.f32 %v160, %v186
  %v235 = vadd.f32 %v161, %v187
  %v236 = vadd.f32 %v162, %v188
  %v237 = vadd.f32 %v163, %v189
  %v238 = vadd.f32 %v164, %v186
  %v239 = vadd.f32 %v165, %v187
  %v240 = vadd.f32 %v166, %v188
  %v241 = vadd.f32 %v167, %v189
  %v242 = vadd.f32 %v168, %v186
  %v243 = vadd.f32 %v169, %v187
  %v244 = vadd.f32 %v170, %v188
  %v245 = vadd.f32 %v171, %v189
  %v246 = vadd.f32 %v172, %v186
  %v247 = vadd.f32 %v173, %v187
  %v248 = vadd.f32 %v174, %v188
  %v249 = vadd.f32 %v175, %v189
  %v250 = vadd.f32 %v176, %v186
  %v251 = vadd.f32 %v177, %v187
  %v252 = vadd.f32 %v178, %v188
  %v253 = vadd.f32 %v179, %v189
  %v254 = vadd.f32 %v180, %v186
  %v255 = vadd.f32 %v181, %v187
  %v256 = vadd.f32 %v182, %v188
  %v257 = vadd.f32 %v183, %v189
  %258 = vst [vmem:[%s3] sm:$0xff] %v194
  %259 = vst [vmem:[%s3 + $0x8] sm:$0xff] %v195
  %260 = vst [vmem:[%s3 + $0x10] sm:$0xff] %v196
  %261 = vst [vmem:[%s3 + $0x18] sm:$0xff] %v197
  %262 = vst [vmem:[%s3 + $0x20] sm:$0xff] %v198
  %263 = vst [vmem:[%s3 + $0x28] sm:$0xff] %v199
  %264 = vst [vmem:[%s3 + $0x30] sm:$0xff] %v200
  %265 = vst [vmem:[%s3 + $0x38] sm:$0xff] %v201
  %266 = vst [vmem:[%s3 + $0x40] sm:$0xff] %v202
  %267 = vst [vmem:[%s3 + $0x48] sm:$0xff] %v203
  %268 = vst [vmem:[%s3 + $0x50] sm:$0xff] %v204
  %269 = vst [vmem:[%s3 + $0x58] sm:$0xff] %v205
  %270 = vst [vmem:[%s3 + $0x60] sm:$0xff] %v206
  %271 = vst [vmem:[%s3 + $0x68] sm:$0xff] %v207
  %272 = vst [vmem:[%s3 + $0x70] sm:$0xff] %v208
  %273 = vst [vmem:[%s3 + $0x78] sm:$0xff] %v209
  %274 = vst [vmem:[%s3 + $0x80] sm:$0xff] %v210
  %275 = vst [vmem:[%s3 + $0x88] sm:$0xff] %v211
  %276 = vst [vmem:[%s3 + $0x90] sm:$0xff] %v212
  %277 = vst [vmem:[%s3 + $0x98] sm:$0xff] %v213
  %278 = vst [vmem:[%s3 + $0xa0] sm:$0xff] %v214
  %279 = vst [vmem:[%s3 + $0xa8] sm:$0xff] %v215
  %280 = vst [vmem:[%s3 + $0xb0] sm:$0xff] %v216
  %281 = vst [vmem:[%s3 + $0xb8] sm:$0xff] %v217
  %282 = vst [vmem:[%s3 + $0xc0] sm:$0xff] %v218
  %283 = vst [vmem:[%s3 + $0xc8] sm:$0xff] %v219
  %284 = vst [vmem:[%s3 + $0xd0] sm:$0xff] %v220
  %285 = vst [vmem:[%s3 + $0xd8] sm:$0xff] %v221
  %286 = vst [vmem:[%s3 + $0xe0] sm:$0xff] %v222
  %287 = vst [vmem:[%s3 + $0xe8] sm:$0xff] %v223
  %288 = vst [vmem:[%s3 + $0xf0] sm:$0xff] %v224
  %289 = vst [vmem:[%s3 + $0xf8] sm:$0xff] %v225
  %290 = vst [vmem:[%s3 + $0x100] sm:$0xff] %v226
  %291 = vst [vmem:[%s3 + $0x108] sm:$0xff] %v227
  %292 = vst [vmem:[%s3 + $0x110] sm:$0xff] %v228
  %293 = vst [vmem:[%s3 + $0x118] sm:$0xff] %v229
  %294 = vst [vmem:[%s3 + $0x120] sm:$0xff] %v230
  %295 = vst [vmem:[%s3 + $0x128] sm:$0xff] %v231
  %296 = vst [vmem:[%s3 + $0x130] sm:$0xff] %v232
  %297 = vst [vmem:[%s3 + $0x138] sm:$0xff] %v233
  %298 = vst [vmem:[%s3 + $0x140] sm:$0xff] %v234
  %299 = vst [vmem:[%s3 + $0x148] sm:$0xff] %v235
  %300 = vst [vmem:[%s3 + $0x150] sm:$0xff] %v236
  %301 = vst [vmem:[%s3 + $0x158] sm:$0xff] %v237
  %302 = vst [vmem:[%s3 + $0x160] sm:$0xff] %v238
  %303 = vst [vmem:[%s3 + $0x168] sm:$0xff] %v239
  %304 = vst [vmem:[%s3 + $0x170] sm:$0xff] %v240
  %305 = vst [vmem:[%s3 + $0x178] sm:$0xff] %v241
  %306 = vst [vmem:[%s3 + $0x180] sm:$0xff] %v242
  %307 = vst [vmem:[%s3 + $0x188] sm:$0xff] %v243
  %308 = vst [vmem:[%s3 + $0x190] sm:$0xff] %v244
  %309 = vst [vmem:[%s3 + $0x198] sm:$0xff] %v245
  %310 = vst [vmem:[%s3 + $0x1a0] sm:$0xff] %v246
  %311 = vst [vmem:[%s3 + $0x1a8] sm:$0xff] %v247
  %312 = vst [vmem:[%s3 + $0x1b0] sm:$0xff] %v248
  %313 = vst [vmem:[%s3 + $0x1b8] sm:$0xff] %v249
  %314 = vst [vmem:[%s3 + $0x1c0] sm:$0xff] %v250
  %315 = vst [vmem:[%s3 + $0x1c8] sm:$0xff] %v251
  %316 = vst [vmem:[%s3 + $0x1d0] sm:$0xff] %v252
  %317 = vst [vmem:[%s3 + $0x1d8] sm:$0xff] %v253
  %318 = vst [vmem:[%s3 + $0x1e0] sm:$0xff] %v254
  %319 = vst [vmem:[%s3 + $0x1e8] sm:$0xff] %v255
  %320 = vst [vmem:[%s3 + $0x1f0] sm:$0xff] %v256
  %321 = vst [vmem:[%s3 + $0x1f8] sm:$0xff] %v257
  // Predicated region
  $region14: #{unet_innermost_forward.5} parent=0 // pred_check
    _
  $region15: #{unet_innermost_forward.5} parent=0 // pred_check_branch
    %323 = sbr.rel (0) target = $region17
  $region16: #{unet_innermost_forward.5} parent=0 // pred_region
    _
  $region17: #{unet_innermost_forward.5} parent=0 // pred_fallthru
    _
  // Predicated region
  $region18: #{unet_innermost_forward.5} parent=0 // pred_check
    _
  $region19: #{unet_innermost_forward.5} parent=0 // pred_check_branch
    %325 = sbr.rel (0) target = $region21
  $region20: #{unet_innermost_forward.5} parent=0 // pred_region
    _
  $region21: #{unet_innermost_forward.5} parent=0 // pred_fallthru
    _

</llo_original>
